<compile_context>
chip_gen: v7x
topology: tpu7x:2x2x1
jax: 0.10.0
libtpu: 0.0.40
codegen_flags: <defaults>
</compile_context>

<pallas_src>
import functools

import jax
import jax.numpy as jnp
from jax import lax
from jax.experimental import pallas as pl
from jax.experimental.pallas import tpu as pltpu


def _subpixel_offsets(k, lo):
    """Sub-pixel decomposition of a stride-2 transposed conv.

    For each output parity p in {0, 1} returns {d: a}: kernel tap a (in the
    flipped / direct-conv orientation) reads un-dilated input offset d, i.e.
    y[2q + p] += x[q + d] * w_conv[a]."""
    offs = {0: {}, 1: {}}
    for p in (0, 1):
        for a in range(k):
            if (p + a - lo) % 2 == 0:
                offs[p][(p + a - lo) // 2] = a
    non_empty = [o for o in offs.values() if o]
    d_min = min(min(o) for o in non_empty)
    d_max = max(max(o) for o in non_empty)
    return offs, d_min, d_max


def _upconv_kernel(xlo_ref, xhi_ref, w_ref, b_ref, o_ref, *, tq, w_cols, hr,
                   row_offs):
    """One (image, row-tile) step of the fused ConvTranspose2d + ReLU.

    xlo_ref/xhi_ref: (1, tq, Wp, Cin)  adjacent row blocks of the padded input
    w_ref:  (2, hr+1, hr+1, Cin, 2*cpad)  resident per-tap weights
    b_ref:  (1, 2*cpad)                   resident bias
    o_ref:  (1, tq, 2, W, 2*cpad)  output block; dim 2 = row parity, lane dim =
            (column parity, Cout) so stores are dense and already interleaved.
    """
    xlo = xlo_ref[0]                        # (tq, Wp, Cin)
    xhi = xhi_ref[0]
    bias = b_ref[...].astype(jnp.float32)   # (1, 2*cpad)
    cin = xlo.shape[-1]
    c2 = o_ref.shape[-1]

    for py in (0, 1):                        # output row parity (static)
        acc = jnp.zeros((tq * w_cols, c2), jnp.float32)
        for j in row_offs[py]:               # input row offsets used by py
            rows = xlo if j == 0 else jnp.concatenate([xlo[j:], xhi[:j]], axis=0)
            for i in range(hr + 1):          # union of column offsets (both px)
                patch = rows[:, i:i + w_cols, :].reshape(tq * w_cols, cin)
                acc = acc + jnp.dot(patch, w_ref[py, j, i],
                                    preferred_element_type=jnp.float32)
        y = jnp.maximum(acc + bias, 0.0)
        o_ref[0, :, py, :, :] = y.reshape(tq, w_cols, c2).astype(o_ref.dtype)


def _resident_spec(shape):
    """Constant-index (VMEM-resident) BlockSpec; single-buffered if supported."""
    index_map = lambda *_: (0,) * len(shape)
    if hasattr(pl, "Buffered"):
        try:
            return pl.BlockSpec(shape, index_map, pipeline_mode=pl.Buffered(1))
        except TypeError:
            pass
    return pl.BlockSpec(shape, index_map)


def upconv_pallas(x, weight_t, bias, *, kernel, stride=2, output_padding=1,
                  tq=None, compute_dtype=None, channels_last=False,
                  vmem_limit_bytes=64 * 1024 * 1024):
    """ReLU(ConvTranspose2d(stride=2, padding=k//2, output_padding=1)(x)).

    x:        (N, Cin, H, W)
    weight_t: (Cin, Cout, k, k)   (PyTorch ConvTranspose2d layout)
    bias:     (Cout,)
    returns   (N, Cout, 2H, 2W)   (NHWC instead if channels_last=True)
    """
    if stride != 2 or output_padding != 1:
        raise NotImplementedError("UpConv uses stride=2, output_padding=1")
    k = kernel
    if k % 2 != 1:
        raise NotImplementedError("odd kernel sizes only")

    N, Cin, H, W = x.shape
    Cout = weight_t.shape[1]
    pad = k // 2
    lo = k - 1 - pad
    Ho, Wo = 2 * H, 2 * W

    cdtype = jnp.dtype(compute_dtype) if compute_dtype is not None else x.dtype
    out_dtype = x.dtype

    offs, d_min, d_max = _subpixel_offsets(k, lo)
    hr = d_max - d_min                               # row/col halo (= (k-1)//2)
    row_offs = {p: sorted(d - d_min for d in offs[p]) for p in (0, 1)}

    # ---- tile sizes / grid ---------------------------------------------------
    if tq is None:
        tq = max(8, 512 // max(W, 1))                # ~512 GEMM rows per step
    tq = max(tq, hr, 1)
    tq = min(tq, max(H, hr))
    n_t = pl.cdiv(H, tq)
    if N * n_t < 2 and H > hr:                       # keep both v7x TCs busy
        tq = max(hr, -(-H // 2))
        n_t = pl.cdiv(H, tq)

    # Lane padding only when it does not inflate HBM writes (Cout >= 128);
    # 2*cpad is then a multiple of 256 (full MXU width on v6e/v7x).
    cpad = ((Cout + 127) // 128) * 128 if Cout >= 128 else Cout
    c2 = 2 * cpad

    # ---- operand layout (cheap one-pass ops on the small input/weights) -------
    pad_lo = -d_min
    hp = (n_t + 1) * tq          # one extra row block so the "hi" halo block
    wp = W + hr                  # (t + 1) always exists
    xh = jnp.transpose(x, (0, 2, 3, 1)).astype(cdtype)             # NHWC
    xpad = jnp.zeros((N, hp, wp, Cin), cdtype)
    xpad = xpad.at[:, pad_lo:pad_lo + H, pad_lo:pad_lo + W, :].set(xh)

    # Direct-conv orientation: flip spatially, swap in/out channels.
    w_conv = jnp.flip(weight_t, axis=(2, 3)).transpose(1, 0, 2, 3)  # (Cout,Cin,k,k)
    wtap = jnp.zeros((2, hr + 1, hr + 1, Cin, c2), cdtype)
    for py in (0, 1):
        for dj, a in offs[py].items():
            for px in (0, 1):
                for di, b in offs[px].items():
                    wtap = wtap.at[py, dj - d_min, di - d_min, :,
                                   px * cpad:px * cpad + Cout].set(
                        w_conv[:, :, a, b].T.astype(cdtype))

    b2 = jnp.zeros((1, c2), jnp.float32)
    b2 = b2.at[0, :Cout].set(bias.astype(jnp.float32))
    b2 = b2.at[0, cpad:cpad + Cout].set(bias.astype(jnp.float32))

    # ---- pallas_call -----------------------------------------------------------
    hq = n_t * tq
    kern = functools.partial(_upconv_kernel, tq=tq, w_cols=W, hr=hr,
                             row_offs=row_offs)

    x_spec_lo = pl.BlockSpec((1, tq, wp, Cin), lambda n, t: (n, t, 0, 0))
    x_spec_hi = pl.BlockSpec((1, tq, wp, Cin), lambda n, t: (n, t + 1, 0, 0))
    w_spec = _resident_spec((2, hr + 1, hr + 1, Cin, c2))
    b_spec = _resident_spec((1, c2))
    o_spec = pl.BlockSpec((1, tq, 2, W, c2), lambda n, t: (n, t, 0, 0, 0))

    out = pl.pallas_call(
        kern,
        out_shape=jax.ShapeDtypeStruct((N, hq, 2, W, c2), out_dtype),
        grid_spec=pltpu.PrefetchScalarGridSpec(
            num_scalar_prefetch=0,
            grid=(N, n_t),
            in_specs=[x_spec_lo, x_spec_hi, w_spec, b_spec],
            out_specs=o_spec,
        ),
        compiler_params=pltpu.CompilerParams(
            dimension_semantics=("parallel", "parallel"),
            vmem_limit_bytes=vmem_limit_bytes,
        ),
    )(xpad, xpad, wtap, b2)

    # ---- un-pad / final layout --------------------------------------------------
    y = out.reshape(N, hq, 2, W, 2, cpad)[..., :Cout]
    y = y.reshape(N, 2 * hq, Wo, Cout)[:, :Ho]       # interleaved NHWC (pure view
    if channels_last:                                 # when no padding was needed)
        return y
    # NHWC -> NCHW only for PyTorch layout parity (skip with channels_last=True).
    return jnp.transpose(y, (0, 3, 1, 2))


def _reference_upconv(x, weight_t, bias, *, kernel, stride=2, output_padding=1):
    """Independent reference straight from the ConvTranspose2d scatter definition
    (PyTorch semantics, padding=k//2) + bias + ReLU — not derived from the
    dilated-conv mapping used by the kernel."""
    N, Cin, H, W = x.shape
    Cout = weight_t.shape[1]
    k = kernel
    pad = k // 2
    Ho = (H - 1) * stride - 2 * pad + k + output_padding
    Wo = (W - 1) * stride - 2 * pad + k + output_padding
    hf = max((H - 1) * stride + k, pad + Ho)
    wf = max((W - 1) * stride + k, pad + Wo)
    y = jnp.zeros((N, Cout, hf, wf), jnp.float32)
    x32 = x.astype(jnp.float32)
    for kh in range(k):
        for kw in range(k):
            c = jnp.einsum("nchw,cd->ndhw", x32,
                           weight_t[:, :, kh, kw].astype(jnp.float32),
                           precision=lax.Precision.HIGHEST)
            y = y.at[:, :, kh:kh + (H - 1) * stride + 1:stride,
                           kw:kw + (W - 1) * stride + 1:stride].add(c)
    y = y[:, :, pad:pad + Ho, pad:pad + Wo]
    y = y + bias.reshape(1, -1, 1, 1).astype(jnp.float32)
    return jnp.maximum(y, 0.0)


if __name__ == "__main__":
    key = jax.random.PRNGKey(0)
    kx, kw, kb = jax.random.split(key, 3)

    N, Cin, H, W = 2, 4, 16, 16
    Cout, kern = 8, 3

    x = jax.random.normal(kx, (N, Cin, H, W), dtype=jnp.float32)
    fan_in = Cin * kern * kern
    # PyTorch ConvTranspose2d weight layout: (Cin, Cout, k, k)
    weight_t = jax.random.normal(kw, (Cin, Cout, kern, kern),
                                 dtype=jnp.float32) * (1.0 / fan_in) ** 0.5
    bias = jax.random.normal(kb, (Cout,), dtype=jnp.float32) * 0.01

    ref = _reference_upconv(x, weight_t, bias, kernel=kern)

    # f32 operands (default): strict tolerance against the independent reference.
    fn = jax.jit(functools.partial(upconv_pallas, kernel=kern))
    out = fn(x, weight_t, bias)
    jax.block_until_ready(out)
    assert out.shape == (N, Cout, 2 * H, 2 * W), out.shape
    assert jnp.allclose(out, ref, atol=1e-4, rtol=1e-4), \
        float(jnp.max(jnp.abs(out - ref)))

    # bf16 operands / f32 MXU accumulation (production path: halves HBM traffic).
    fn_bf16 = jax.jit(functools.partial(upconv_pallas, kernel=kern,
                                        compute_dtype=jnp.bfloat16))
    out_bf16 = fn_bf16(x, weight_t, bias)
    jax.block_until_ready(out_bf16)
    assert jnp.allclose(out_bf16, ref, atol=5e-2, rtol=5e-2), \
        float(jnp.max(jnp.abs(out_bf16 - ref)))

    print("KERNEL_OK")
</pallas_src>

<mosaic_0001>
module attributes {stable_mosaic.version = 11 : i64} {
  func.func @_upconv_kernel(%arg0: i32, %arg1: i32, %arg2: memref<1x16x17x4xf32, #tpu.memory_space<vmem>>, %arg3: memref<1x16x17x4xf32, #tpu.memory_space<vmem>>, %arg4: memref<2x2x2x4x16xf32, #tpu.memory_space<vmem>>, %arg5: memref<1x16xf32, #tpu.memory_space<vmem>>, %arg6: memref<1x16x2x16x16xf32, #tpu.memory_space<vmem>>) attributes {dimension_semantics = [#tpu.dimension_semantics<parallel>, #tpu.dimension_semantics<parallel>], iteration_bounds = array<i64: 2, 1>, scalar_prefetch = 0 : i64, scratch_operands = 0 : i64, tpu.core_type = #tpu.core_type<tc>, window_params = [{transform_indices = @transform_0, window_bounds = array<i64: 1, 16, 17, 4>}, {transform_indices = @transform_1, window_bounds = array<i64: 1, 16, 17, 4>}, {pipeline_mode = #tpu.pipeline_mode<synchronous>, transform_indices = @transform_2, window_bounds = array<i64: 2, 2, 2, 4, 16>}, {pipeline_mode = #tpu.pipeline_mode<synchronous>, transform_indices = @transform_3, window_bounds = array<i64: 1, 16>}, {transform_indices = @transform_4, window_bounds = array<i64: 1, 16, 2, 16, 16>}]} {
    %c0 = arith.constant 0 : index
    %c0_0 = arith.constant 0 : index
    %c0_1 = arith.constant 0 : index
    %c0_2 = arith.constant 0 : index
    %0 = vector.load %arg2[%c0, %c0_0, %c0_1, %c0_2] : memref<1x16x17x4xf32, #tpu.memory_space<vmem>>, vector<1x16x17x4xf32>
    %1 = vector.shape_cast %0 : vector<1x16x17x4xf32> to vector<16x17x4xf32>
    %c0_3 = arith.constant 0 : index
    %c0_4 = arith.constant 0 : index
    %c0_5 = arith.constant 0 : index
    %c0_6 = arith.constant 0 : index
    %2 = vector.load %arg3[%c0_3, %c0_4, %c0_5, %c0_6] : memref<1x16x17x4xf32, #tpu.memory_space<vmem>>, vector<1x16x17x4xf32>
    %3 = vector.shape_cast %2 : vector<1x16x17x4xf32> to vector<16x17x4xf32>
    %c0_7 = arith.constant 0 : index
    %c0_8 = arith.constant 0 : index
    %4 = vector.load %arg5[%c0_7, %c0_8] : memref<1x16xf32, #tpu.memory_space<vmem>>, vector<1x16xf32>
    %cst = arith.constant 0.000000e+00 : f32
    %5 = vector.broadcast %cst : f32 to vector<256x16xf32>
    %6 = vector.extract_strided_slice %1 {offsets = [0, 0, 0], sizes = [16, 16, 4], strides = [1, 1, 1]} : vector<16x17x4xf32> to vector<16x16x4xf32>
    %7 = vector.shape_cast %6 : vector<16x16x4xf32> to vector<256x4xf32>
    %c0_9 = arith.constant 0 : index
    %c0_10 = arith.constant 0 : index
    %c0_11 = arith.constant 0 : index
    %c0_12 = arith.constant 0 : index
    %c0_13 = arith.constant 0 : index
    %8 = vector.load %arg4[%c0_9, %c0_10, %c0_11, %c0_12, %c0_13] : memref<2x2x2x4x16xf32, #tpu.memory_space<vmem>>, vector<1x1x1x4x16xf32>
    %9 = vector.shape_cast %8 : vector<1x1x1x4x16xf32> to vector<4x16xf32>
    %cst_14 = arith.constant dense<0.000000e+00> : vector<256x16xf32>
    %10 = tpu.matmul %7, %9, %cst_14 {dimension_numbers = #tpu.dot_dimension_numbers<[1], [0], [0], [1], [0, 0, 1, 1], [], []>} : vector<256x4xf32>, vector<4x16xf32>, vector<256x16xf32> -> vector<256x16xf32>
    %11 = arith.addf %5, %10 : vector<256x16xf32>
    %12 = vector.extract_strided_slice %1 {offsets = [0, 1, 0], sizes = [16, 16, 4], strides = [1, 1, 1]} : vector<16x17x4xf32> to vector<16x16x4xf32>
    %13 = vector.shape_cast %12 : vector<16x16x4xf32> to vector<256x4xf32>
    %c0_15 = arith.constant 0 : index
    %c0_16 = arith.constant 0 : index
    %c1 = arith.constant 1 : index
    %c0_17 = arith.constant 0 : index
    %c0_18 = arith.constant 0 : index
    %14 = vector.load %arg4[%c0_15, %c0_16, %c1, %c0_17, %c0_18] : memref<2x2x2x4x16xf32, #tpu.memory_space<vmem>>, vector<1x1x1x4x16xf32>
    %15 = vector.shape_cast %14 : vector<1x1x1x4x16xf32> to vector<4x16xf32>
    %cst_19 = arith.constant dense<0.000000e+00> : vector<256x16xf32>
    %16 = tpu.matmul %13, %15, %cst_19 {dimension_numbers = #tpu.dot_dimension_numbers<[1], [0], [0], [1], [0, 0, 1, 1], [], []>} : vector<256x4xf32>, vector<4x16xf32>, vector<256x16xf32> -> vector<256x16xf32>
    %17 = arith.addf %11, %16 : vector<256x16xf32>
    %18 = vector.broadcast %4 : vector<1x16xf32> to vector<256x16xf32>
    %19 = arith.addf %17, %18 : vector<256x16xf32>
    %cst_20 = arith.constant 0.000000e+00 : f32
    %20 = vector.broadcast %cst_20 : f32 to vector<256x16xf32>
    %21 = arith.maximumf %19, %20 : vector<256x16xf32>
    %22 = vector.shape_cast %21 : vector<256x16xf32> to vector<16x16x16xf32>
    %c0_21 = arith.constant 0 : index
    %c0_22 = arith.constant 0 : index
    %c0_23 = arith.constant 0 : index
    %c0_24 = arith.constant 0 : index
    %c0_25 = arith.constant 0 : index
    %23 = vector.load %arg6[%c0_21, %c0_22, %c0_23, %c0_24, %c0_25] : memref<1x16x2x16x16xf32, #tpu.memory_space<vmem>>, vector<1x16x1x16x16xf32>
    %24 = vector.shape_cast %23 : vector<1x16x1x16x16xf32> to vector<16x16x16xf32>
    %25 = vector.shape_cast %22 : vector<16x16x16xf32> to vector<1x16x1x16x16xf32>
    tpu.vector_store %arg6[%c0_21, %c0_22, %c0_23, %c0_24, %c0_25], %25 {strides = array<i32>} : memref<1x16x2x16x16xf32, #tpu.memory_space<vmem>>, vector<1x16x1x16x16xf32>,
    %cst_26 = arith.constant 0.000000e+00 : f32
    %26 = vector.broadcast %cst_26 : f32 to vector<256x16xf32>
    %27 = vector.extract_strided_slice %1 {offsets = [0, 0, 0], sizes = [16, 16, 4], strides = [1, 1, 1]} : vector<16x17x4xf32> to vector<16x16x4xf32>
    %28 = vector.shape_cast %27 : vector<16x16x4xf32> to vector<256x4xf32>
    %c1_27 = arith.constant 1 : index
    %c0_28 = arith.constant 0 : index
    %c0_29 = arith.constant 0 : index
    %c0_30 = arith.constant 0 : index
    %c0_31 = arith.constant 0 : index
    %29 = vector.load %arg4[%c1_27, %c0_28, %c0_29, %c0_30, %c0_31] : memref<2x2x2x4x16xf32, #tpu.memory_space<vmem>>, vector<1x1x1x4x16xf32>
    %30 = vector.shape_cast %29 : vector<1x1x1x4x16xf32> to vector<4x16xf32>
    %cst_32 = arith.constant dense<0.000000e+00> : vector<256x16xf32>
    %31 = tpu.matmul %28, %30, %cst_32 {dimension_numbers = #tpu.dot_dimension_numbers<[1], [0], [0], [1], [0, 0, 1, 1], [], []>} : vector<256x4xf32>, vector<4x16xf32>, vector<256x16xf32> -> vector<256x16xf32>
    %32 = arith.addf %26, %31 : vector<256x16xf32>
    %33 = vector.extract_strided_slice %1 {offsets = [0, 1, 0], sizes = [16, 16, 4], strides = [1, 1, 1]} : vector<16x17x4xf32> to vector<16x16x4xf32>
    %34 = vector.shape_cast %33 : vector<16x16x4xf32> to vector<256x4xf32>
    %c1_33 = arith.constant 1 : index
    %c0_34 = arith.constant 0 : index
    %c1_35 = arith.constant 1 : index
    %c0_36 = arith.constant 0 : index
    %c0_37 = arith.constant 0 : index
    %35 = vector.load %arg4[%c1_33, %c0_34, %c1_35, %c0_36, %c0_37] : memref<2x2x2x4x16xf32, #tpu.memory_space<vmem>>, vector<1x1x1x4x16xf32>
    %36 = vector.shape_cast %35 : vector<1x1x1x4x16xf32> to vector<4x16xf32>
    %cst_38 = arith.constant dense<0.000000e+00> : vector<256x16xf32>
    %37 = tpu.matmul %34, %36, %cst_38 {dimension_numbers = #tpu.dot_dimension_numbers<[1], [0], [0], [1], [0, 0, 1, 1], [], []>} : vector<256x4xf32>, vector<4x16xf32>, vector<256x16xf32> -> vector<256x16xf32>
    %38 = arith.addf %32, %37 : vector<256x16xf32>
    %39 = vector.extract_strided_slice %1 {offsets = [1, 0, 0], sizes = [15, 17, 4], strides = [1, 1, 1]} : vector<16x17x4xf32> to vector<15x17x4xf32>
    %40 = vector.extract_strided_slice %3 {offsets = [0, 0, 0], sizes = [1, 17, 4], strides = [1, 1, 1]} : vector<16x17x4xf32> to vector<1x17x4xf32>
    %41 = tpu.concatenate %39, %40 in 0 : vector<15x17x4xf32>, vector<1x17x4xf32> -> vector<16x17x4xf32>
    %42 = vector.extract_strided_slice %41 {offsets = [0, 0, 0], sizes = [16, 16, 4], strides = [1, 1, 1]} : vector<16x17x4xf32> to vector<16x16x4xf32>
    %43 = vector.shape_cast %42 : vector<16x16x4xf32> to vector<256x4xf32>
    %c1_39 = arith.constant 1 : index
    %c1_40 = arith.constant 1 : index
    %c0_41 = arith.constant 0 : index
    %c0_42 = arith.constant 0 : index
    %c0_43 = arith.constant 0 : index
    %44 = vector.load %arg4[%c1_39, %c1_40, %c0_41, %c0_42, %c0_43] : memref<2x2x2x4x16xf32, #tpu.memory_space<vmem>>, vector<1x1x1x4x16xf32>
    %45 = vector.shape_cast %44 : vector<1x1x1x4x16xf32> to vector<4x16xf32>
    %cst_44 = arith.constant dense<0.000000e+00> : vector<256x16xf32>
    %46 = tpu.matmul %43, %45, %cst_44 {dimension_numbers = #tpu.dot_dimension_numbers<[1], [0], [0], [1], [0, 0, 1, 1], [], []>} : vector<256x4xf32>, vector<4x16xf32>, vector<256x16xf32> -> vector<256x16xf32>
    %47 = arith.addf %38, %46 : vector<256x16xf32>
    %48 = vector.extract_strided_slice %41 {offsets = [0, 1, 0], sizes = [16, 16, 4], strides = [1, 1, 1]} : vector<16x17x4xf32> to vector<16x16x4xf32>
    %49 = vector.shape_cast %48 : vector<16x16x4xf32> to vector<256x4xf32>
    %c1_45 = arith.constant 1 : index
    %c1_46 = arith.constant 1 : index
    %c1_47 = arith.constant 1 : index
    %c0_48 = arith.constant 0 : index
    %c0_49 = arith.constant 0 : index
    %50 = vector.load %arg4[%c1_45, %c1_46, %c1_47, %c0_48, %c0_49] : memref<2x2x2x4x16xf32, #tpu.memory_space<vmem>>, vector<1x1x1x4x16xf32>
    %51 = vector.shape_cast %50 : vector<1x1x1x4x16xf32> to vector<4x16xf32>
    %cst_50 = arith.constant dense<0.000000e+00> : vector<256x16xf32>
    %52 = tpu.matmul %49, %51, %cst_50 {dimension_numbers = #tpu.dot_dimension_numbers<[1], [0], [0], [1], [0, 0, 1, 1], [], []>} : vector<256x4xf32>, vector<4x16xf32>, vector<256x16xf32> -> vector<256x16xf32>
    %53 = arith.addf %47, %52 : vector<256x16xf32>
    %54 = vector.broadcast %4 : vector<1x16xf32> to vector<256x16xf32>
    %55 = arith.addf %53, %54 : vector<256x16xf32>
    %cst_51 = arith.constant 0.000000e+00 : f32
    %56 = vector.broadcast %cst_51 : f32 to vector<256x16xf32>
    %57 = arith.maximumf %55, %56 : vector<256x16xf32>
    %58 = vector.shape_cast %57 : vector<256x16xf32> to vector<16x16x16xf32>
    %c0_52 = arith.constant 0 : index
    %c0_53 = arith.constant 0 : index
    %c1_54 = arith.constant 1 : index
    %c0_55 = arith.constant 0 : index
    %c0_56 = arith.constant 0 : index
    %59 = vector.load %arg6[%c0_52, %c0_53, %c1_54, %c0_55, %c0_56] : memref<1x16x2x16x16xf32, #tpu.memory_space<vmem>>, vector<1x16x1x16x16xf32>
    %60 = vector.shape_cast %59 : vector<1x16x1x16x16xf32> to vector<16x16x16xf32>
    %61 = vector.shape_cast %58 : vector<16x16x16xf32> to vector<1x16x1x16x16xf32>
    tpu.vector_store %arg6[%c0_52, %c0_53, %c1_54, %c0_55, %c0_56], %61 {strides = array<i32>} : memref<1x16x2x16x16xf32, #tpu.memory_space<vmem>>, vector<1x16x1x16x16xf32>,
    return
  }
  func.func @transform_0(%arg0: i32, %arg1: i32) -> (i32, i32, i32, i32) {
    %c0_i32 = arith.constant 0 : i32
    %c0_i32_0 = arith.constant 0 : i32
    %c0_i32_1 = arith.constant 0 : i32
    return %arg0, %arg1, %c0_i32, %c0_i32_0 : i32, i32, i32, i32
  }
  func.func @transform_1(%arg0: i32, %arg1: i32) -> (i32, i32, i32, i32) {
    %c1_i32 = arith.constant 1 : i32
    %0 = arith.addi %arg1, %c1_i32 : i32
    %c0_i32 = arith.constant 0 : i32
    %c0_i32_0 = arith.constant 0 : i32
    %c0_i32_1 = arith.constant 0 : i32
    return %arg0, %0, %c0_i32, %c0_i32_0 : i32, i32, i32, i32
  }
  func.func @transform_2(%arg0: i32, %arg1: i32) -> (i32, i32, i32, i32, i32) {
    %c0_i32 = arith.constant 0 : i32
    %c0_i32_0 = arith.constant 0 : i32
    %c0_i32_1 = arith.constant 0 : i32
    %c0_i32_2 = arith.constant 0 : i32
    %c0_i32_3 = arith.constant 0 : i32
    %c0_i32_4 = arith.constant 0 : i32
    return %c0_i32, %c0_i32_0, %c0_i32_1, %c0_i32_2, %c0_i32_3 : i32, i32, i32, i32, i32
  }
  func.func @transform_3(%arg0: i32, %arg1: i32) -> (i32, i32) {
    %c0_i32 = arith.constant 0 : i32
    %c0_i32_0 = arith.constant 0 : i32
    %c0_i32_1 = arith.constant 0 : i32
    return %c0_i32, %c0_i32_0 : i32, i32
  }
  func.func @transform_4(%arg0: i32, %arg1: i32) -> (i32, i32, i32, i32, i32) {
    %c0_i32 = arith.constant 0 : i32
    %c0_i32_0 = arith.constant 0 : i32
    %c0_i32_1 = arith.constant 0 : i32
    %c0_i32_2 = arith.constant 0 : i32
    return %arg0, %arg1, %c0_i32, %c0_i32_0, %c0_i32_1 : i32, i32, i32, i32, i32
  }
}

</mosaic_0001>

<llo_original>
// kernel: upconv_pallas.1
$region0: #{upconv_pallas.1}
  #allocation0 [shape = 'u32[]', space=smem, size = 0x4, offset = 0x4, fixed_abs, tag = 'smem constant byte address 0x4 - core index']
  #allocation1 [shape = 'u32[144,128]{1,0:T(1,128)}', space=vmem, size = 0x12000, scoped, tag = 'internal scratch']
  %s0 = inlined_call_operand.hbm [shape: f32[2,32,17,4], index: 0, kind: input, shape index: {}, may-alias: {0,1}]
  %s1 = inlined_call_operand.hbm [shape: f32[2,32,17,4], index: 1, kind: input, shape index: {}, may-alias: {0,1}]
  %s2 = inlined_call_operand.hbm [shape: f32[2,2,2,4,16], index: 2, kind: input, shape index: {}]
  %s3 = inlined_call_operand.hbm [shape: f32[1,16], index: 3, kind: input, shape index: {}]
  %s4 = inlined_call_operand.hbm [shape: f32[2,16,2,16,16], index: 4, kind: output, shape index: {}]
  %s5 = sld [smem:[#allocation0]]
  $region65: #{upconv_pallas.1} parent=0
    _
  %s7 = ssub.s32 1, %s5
  %s8 = scalar_select 0, %s7, %s5
  $region1: #{upconv_pallas.1} parent=0
    #allocation2 [shape = 'u8[393216]{0}', space=vmem, size = 0x60000, scoped, tag = 'input window, operand 0']
    #allocation3 [shape = 's32[2]{0}', space=sflag, size = 0x8, scoped, tag = 'scoped memory for upconv_pallas.1']
    #allocation4 [shape = 's32[2]{0}', space=sflag, size = 0x8, scoped, tag = 'scoped memory for upconv_pallas.1']
    #allocation5 [shape = 'u8[393216]{0}', space=vmem, size = 0x60000, scoped, tag = 'input window, operand 1']
    #allocation6 [shape = 's32[2]{0}', space=sflag, size = 0x8, scoped, tag = 'scoped memory for upconv_pallas.1']
    #allocation7 [shape = 'u8[16384]{0}', space=vmem, size = 0x4000, scoped, tag = 'input window, operand 2, single buffered']
    #allocation8 [shape = 'u8[512]{0}', space=vmem, size = 0x400, scoped, tag = 'input window, operand 3, single buffered']
    #allocation9 [shape = 's32[1]{0}', space=sflag, size = 0x4, scoped, tag = 'scoped memory for upconv_pallas.1']
    #allocation10 [shape = 'u8[524288]{0}', space=vmem, size = 0x80000, scoped, tag = 'output window, operand 0']
    %9 = vsyncpa [#allocation3], 0
    %s10 = scalar_lea.sflag [#allocation3], 1
    %11 = vsyncpa %s10, 0
    %12 = vsyncpa [#allocation6], 0
    %s13 = scalar_lea.sflag [#allocation6], 1
    %14 = vsyncpa %s13, 0
    %15 = vsyncpa [#allocation9], 0
    %16 = vsyncpa [#allocation4], 0
    %s17 = scalar_lea.sflag [#allocation4], 1
    %18 = vsyncpa %s17, 0
    loop: start=0, step=1, limit=4
    $region2: #{upconv_pallas.1} parent=1 // loop_pre_header
      _
    $region3: #{upconv_pallas.1} parent=1 // loop_header
      %s20 = sphi 0, %s24
      %p21 = scmp.ge.s32.totalorder %s20, 4
      %s27 = sphi 0, %s39
      %s28 = sphi 0, %s35
      %s29 = sphi 0, %s27
      %s30 = sphi 0, %s28
      %s31 = sphi 0, %s29
      %s32 = sphi 0, %s30
      %s44 = sphi 0, %s46
      %s47 = sphi 0, %s44
      %s48 = sphi 0, %s47
      %s64 = sphi 0, %s48
      %s74 = sphi 0, %s76
      %s77 = sphi 0, %s74
      %s78 = sphi 0, %s77
      %s94 = sphi 0, %s78
      %s98 = sphi 0, %s98
      %s100 = sphi 0, %s98
      %s101 = sphi 0, %s100
      %s115 = sphi 0, %s101
      %s119 = sphi 0, %s119
      %s121 = sphi 0, %s119
      %s122 = sphi 0, %s121
      %s136 = sphi 0, %s122
      %s144 = sphi 0, %s146
      %s147 = sphi 0, %s144
      %s148 = sphi 0, %s147
      %s164 = sphi 0, %s148
    $region4: #{upconv_pallas.1} parent=1 // loop_header_branch
      %23 = sbr.rel (%p21) target = $region8
    $region5: #{upconv_pallas.1} parent=1 // loop_body
      %s25 = ssub.s32 %s20, 1
      %s26 = ssub.s32 %s20, 2
      %s33 = sadd.s32 1, %s28
      %p34 = scmp.ge.s32.totalorder %s33, 1
      %s35 = scalar_select %p34, 0, %s33
      %s36 = sadd.s32 1, %s27
      %s37 = scalar_select %p34, %s36, %s27
      %p38 = scmp.ge.s32.totalorder %s37, 2
      %s39 = scalar_select %p38, 0, %s37
      %s40 = ssub.s32 %s27, %s39
      %s41 = ssub.s32 %s28, %s35
      %s42 = sor.u32 %s40, %s41
      %p43 = scmp.eq.s32.totalorder %s42, 0
      %s45 = sadd.s32 %s44, 1
      %s46 = scalar_select %p43, %s44, %s45
      %p49 = pneg %p43
      %p50 = scmp.eq.s32.totalorder %s20, 1
      %p51 = por %p49, %p50
      %p52 = scmp.ne.s32.totalorder %s44, %s47
      %p53 = scmp.eq.s32.totalorder %s20, 0
      %p54 = por %p52, %p53
      %p55 = scmp.ne.s32.totalorder %s44, %s47
      %p56 = scmp.eq.s32.totalorder %s25, 1
      %p57 = por %p55, %p56
      %p58 = scmp.ne.s32.totalorder %s47, %s48
      %p59 = scmp.eq.s32.totalorder %s25, 0
      %p60 = por %p58, %p59
      %p61 = scmp.ne.s32.totalorder %s47, %s48
      %p62 = scmp.eq.s32.totalorder %s26, 1
      %p63 = por %p61, %p62
      %p65 = scmp.ne.s32.totalorder %s48, %s64
      %p66 = scmp.eq.s32.totalorder %s26, 0
      %p67 = por %p65, %p66
      %s68 = sadd.s32 %s28, 1
      %s69 = sadd.s32 %s35, 1
      %s70 = ssub.s32 %s27, %s39
      %s71 = ssub.s32 %s68, %s69
      %s72 = sor.u32 %s70, %s71
      %p73 = scmp.eq.s32.totalorder %s72, 0
      %s75 = sadd.s32 %s74, 1
      %s76 = scalar_select %p73, %s74, %s75
      %p79 = pneg %p73
      %p80 = scmp.eq.s32.totalorder %s20, 1
      %p81 = por %p79, %p80
      %p82 = scmp.ne.s32.totalorder %s74, %s77
      %p83 = scmp.eq.s32.totalorder %s20, 0
      %p84 = por %p82, %p83
      %p85 = scmp.ne.s32.totalorder %s74, %s77
      %p86 = scmp.eq.s32.totalorder %s25, 1
      %p87 = por %p85, %p86
      %p88 = scmp.ne.s32.totalorder %s77, %s78
      %p89 = scmp.eq.s32.totalorder %s25, 0
      %p90 = por %p88, %p89
      %p91 = scmp.ne.s32.totalorder %s77, %s78
      %p92 = scmp.eq.s32.totalorder %s26, 1
      %p93 = por %p91, %p92
      %p95 = scmp.ne.s32.totalorder %s78, %s94
      %p96 = scmp.eq.s32.totalorder %s26, 0
      %p97 = por %p95, %p96
      %s99 = sadd.s32 %s98, 1
      %p102 = scmp.eq.s32.totalorder %s20, 1
      %p103 = scmp.ne.s32.totalorder %s98, %s100
      %p104 = scmp.eq.s32.totalorder %s20, 0
      %p105 = por %p103, %p104
      %p106 = scmp.ne.s32.totalorder %s98, %s100
      %p107 = scmp.eq.s32.totalorder %s25, 1
      %p108 = por %p106, %p107
      %p109 = scmp.ne.s32.totalorder %s100, %s101
      %p110 = scmp.eq.s32.totalorder %s25, 0
      %p111 = por %p109, %p110
      %p112 = scmp.ne.s32.totalorder %s100, %s101
      %p113 = scmp.eq.s32.totalorder %s26, 1
      %p114 = por %p112, %p113
      %p116 = scmp.ne.s32.totalorder %s101, %s115
      %p117 = scmp.eq.s32.totalorder %s26, 0
      %p118 = por %p116, %p117
      %s120 = sadd.s32 %s119, 1
      %p123 = scmp.eq.s32.totalorder %s20, 1
      %p124 = scmp.ne.s32.totalorder %s119, %s121
      %p125 = scmp.eq.s32.totalorder %s20, 0
      %p126 = por %p124, %p125
      %p127 = scmp.ne.s32.totalorder %s119, %s121
      %p128 = scmp.eq.s32.totalorder %s25, 1
      %p129 = por %p127, %p128
      %p130 = scmp.ne.s32.totalorder %s121, %s122
      %p131 = scmp.eq.s32.totalorder %s25, 0
      %p132 = por %p130, %p131
      %p133 = scmp.ne.s32.totalorder %s121, %s122
      %p134 = scmp.eq.s32.totalorder %s26, 1
      %p135 = por %p133, %p134
      %p137 = scmp.ne.s32.totalorder %s122, %s136
      %p138 = scmp.eq.s32.totalorder %s26, 0
      %p139 = por %p137, %p138
      %s140 = ssub.s32 %s27, %s39
      %s141 = ssub.s32 %s28, %s35
      %s142 = sor.u32 %s140, %s141
      %p143 = scmp.eq.s32.totalorder %s142, 0
      %s145 = sadd.s32 %s144, 1
      %s146 = scalar_select %p143, %s144, %s145
      %p149 = pneg %p143
      %p150 = scmp.eq.s32.totalorder %s20, 1
      %p151 = por %p149, %p150
      %p152 = scmp.ne.s32.totalorder %s144, %s147
      %p153 = scmp.eq.s32.totalorder %s20, 0
      %p154 = por %p152, %p153
      %p155 = scmp.ne.s32.totalorder %s144, %s147
      %p156 = scmp.eq.s32.totalorder %s25, 1
      %p157 = por %p155, %p156
      %p158 = scmp.ne.s32.totalorder %s147, %s148
      %p159 = scmp.eq.s32.totalorder %s25, 0
      %p160 = por %p158, %p159
      %p161 = scmp.ne.s32.totalorder %s147, %s148
      %p162 = scmp.eq.s32.totalorder %s26, 1
      %p163 = por %p161, %p162
      %p165 = scmp.ne.s32.totalorder %s148, %s164
      %p166 = scmp.eq.s32.totalorder %s26, 0
      %p167 = por %p165, %p166
      %p168 = scmp.le.s32.totalorder 1, %s20
      %p169 = scmp.lt.s32.totalorder %s20, 3
      %p170 = pnand %p168, %p169
      %p171 = pneg %p170
      // Predicated region
      $region9: #{upconv_pallas.1} parent=5 // pred_check
        _
      $region10: #{upconv_pallas.1} parent=5 // pred_check_branch
        %173 = sbr.rel (%p170) target = $region12
      $region11: #{upconv_pallas.1} parent=5 // pred_region
        %s174 = ssub.s32 %s20, 1
        // Predicated region
        $region13: #{upconv_pallas.1} parent=11 // pred_check
          %p175 = pneg %p111
        $region14: #{upconv_pallas.1} parent=11 // pred_check_branch
          %177 = sbr.rel (%p175) target = $region16
        $region15: #{upconv_pallas.1} parent=11 // pred_region
          %s179 = ssub.s32 512, 512
          %180 = vsyncadd [#allocation6], %s179
          %s181 = sshll.u32 [#allocation7], 4
          %s182 = int_to_ptr.vmem [resolvable:$true] %s181
          %187 = dma.hbm_to_vmem [thread:$0]  %s2, 512, %s182, [#allocation6], 64, 64, 4
        $region16: #{upconv_pallas.1} parent=11 // pred_fallthru
          _
        // Predicated region
        $region17: #{upconv_pallas.1} parent=11 // pred_check
          %p188 = pneg %p132
        $region18: #{upconv_pallas.1} parent=11 // pred_check_branch
          %190 = sbr.rel (%p188) target = $region20
        $region19: #{upconv_pallas.1} parent=11 // pred_region
          %s192 = ssub.s32 16, 16
          %193 = vsyncadd [#allocation9], %s192
          %s195 = sshll.u32 [#allocation8], 4
          %s196 = int_to_ptr.vmem [resolvable:$true] %s195
          %198 = dma.hbm_to_vmem [thread:$0]  %s3, 16, %s196, [#allocation9]
        $region20: #{upconv_pallas.1} parent=11 // pred_fallthru
          _
      $region12: #{upconv_pallas.1} parent=5 // pred_fallthru
        _
      %p199 = scmp.lt.s32.totalorder %s20, 2
      // Predicated region
      $region21: #{upconv_pallas.1} parent=5 // pred_check
        %p200 = pneg %p199
      $region22: #{upconv_pallas.1} parent=5 // pred_check_branch
        %202 = sbr.rel (%p200) target = $region24
      $region23: #{upconv_pallas.1} parent=5 // pred_region
        // Predicated region
        $region25: #{upconv_pallas.1} parent=23 // pred_check
          %p203 = pneg %p54
        $region26: #{upconv_pallas.1} parent=23 // pred_check_branch
          %205 = sbr.rel (%p203) target = $region28
        $region27: #{upconv_pallas.1} parent=23 // pred_region
          %s206 = sand.u32 %s44, 1
          %s207 = scalar_lea.sflag [#allocation3], %s206
          %s208 = sand.u32 %s44, 1
          %s209 = smul.addr %s208, 384
          %s210 = scalar_lea.vmem [#allocation2], %s209
          %s211 = smul.u32 16, %s28
          %s213 = ssub.s32 6144, 6144
          %214 = vsyncadd %s207, %s213
          %s215 = smul.addr %s211, 3
          %s216 = smul.addr %s27, 96
          %s217 = sadd.s32 %s215, %s216
          %s218 = smul.addr %s217, 128
          %s219 = scalar_lea.hbm %s0, %s218
          %s220 = sshll.u32 %s210, 4
          %s221 = int_to_ptr.vmem [resolvable:$true] %s220
          %226 = dma.hbm_to_vmem [thread:$0]  %s219, 6144, %s221, %s207, 128, 128, 8
        $region28: #{upconv_pallas.1} parent=23 // pred_fallthru
          _
        // Predicated region
        $region29: #{upconv_pallas.1} parent=23 // pred_check
          %p227 = pneg %p84
        $region30: #{upconv_pallas.1} parent=23 // pred_check_branch
          %229 = sbr.rel (%p227) target = $region32
        $region31: #{upconv_pallas.1} parent=23 // pred_region
          %s230 = sand.u32 %s20, 1
          %s231 = scalar_lea.sflag [#allocation6], %s230
          %s232 = sand.u32 %s74, 1
          %s233 = smul.addr %s232, 384
          %s234 = scalar_lea.vmem [#allocation5], %s233
          %s235 = sadd.s32 %s28, 1
          %s236 = smul.u32 16, %s235
          %s238 = ssub.s32 6144, 6144
          %239 = vsyncadd %s231, %s238
          %s240 = smul.addr %s236, 3
          %s241 = smul.addr %s27, 96
          %s242 = sadd.s32 %s240, %s241
          %s243 = smul.addr %s242, 128
          %s244 = scalar_lea.hbm %s1, %s243
          %s245 = sshll.u32 %s234, 4
          %s246 = int_to_ptr.vmem [resolvable:$true] %s245
          %251 = dma.hbm_to_vmem [thread:$0]  %s244, 6144, %s246, %s231, 128, 128, 8
        $region32: #{upconv_pallas.1} parent=23 // pred_fallthru
          _
      $region24: #{upconv_pallas.1} parent=5 // pred_fallthru
        _
      %p252 = scmp.le.s32.totalorder 1, %s20
      %p253 = scmp.lt.s32.totalorder %s20, 3
      %p254 = pnand %p252, %p253
      %p255 = pneg %p254
      // Predicated region
      $region33: #{upconv_pallas.1} parent=5 // pred_check
        _
      $region34: #{upconv_pallas.1} parent=5 // pred_check_branch
        %257 = sbr.rel (%p254) target = $region36
      $region35: #{upconv_pallas.1} parent=5 // pred_region
        %s258 = ssub.s32 %s20, 1
        %s259 = sand.u32 %s47, 1
        %s260 = scalar_lea.sflag [#allocation3], %s259
        %s261 = sand.u32 %s47, 1
        %s262 = smul.addr %s261, 384
        %s263 = scalar_lea.vmem [#allocation2], %s262
        // Predicated region
        $region37: #{upconv_pallas.1} parent=35 // pred_check
          %p264 = pneg %p60
        $region38: #{upconv_pallas.1} parent=35 // pred_check_branch
          %266 = sbr.rel (%p264) target = $region40
        $region39: #{upconv_pallas.1} parent=35 // pred_region
          %267 = dma.done %s260, 6144
        $region40: #{upconv_pallas.1} parent=35 // pred_fallthru
          _
        %s268 = sand.u32 %s25, 1
        %s269 = scalar_lea.sflag [#allocation6], %s268
        %s270 = sand.u32 %s77, 1
        %s271 = smul.addr %s270, 384
        %s272 = scalar_lea.vmem [#allocation5], %s271
        // Predicated region
        $region41: #{upconv_pallas.1} parent=35 // pred_check
          %p273 = pneg %p90
        $region42: #{upconv_pallas.1} parent=35 // pred_check_branch
          %275 = sbr.rel (%p273) target = $region44
        $region43: #{upconv_pallas.1} parent=35 // pred_region
          %276 = dma.done %s269, 6144
        $region44: #{upconv_pallas.1} parent=35 // pred_fallthru
          _
        // Predicated region
        $region45: #{upconv_pallas.1} parent=35 // pred_check
          %p277 = pneg %p111
        $region46: #{upconv_pallas.1} parent=35 // pred_check_branch
          %279 = sbr.rel (%p277) target = $region48
        $region47: #{upconv_pallas.1} parent=35 // pred_region
          %280 = dma.done [#allocation6], 512
        $region48: #{upconv_pallas.1} parent=35 // pred_fallthru
          _
        // Predicated region
        $region49: #{upconv_pallas.1} parent=35 // pred_check
          %p281 = pneg %p132
        $region50: #{upconv_pallas.1} parent=35 // pred_check_branch
          %283 = sbr.rel (%p281) target = $region52
        $region51: #{upconv_pallas.1} parent=35 // pred_region
          %284 = dma.done [#allocation9], 16
        $region52: #{upconv_pallas.1} parent=35 // pred_fallthru
          _
        %s285 = sand.u32 %s47, 1
        %s286 = scalar_lea.sflag [#allocation3], %s285
        %s287 = sand.u32 %s47, 1
        %s288 = smul.addr %s287, 384
        %s289 = scalar_lea.vmem [#allocation2], %s288
        %p290 = pneg %p60
        %p291 = pneg %p57
        %s292 = sand.u32 %s25, 1
        %s293 = scalar_lea.sflag [#allocation6], %s292
        %s294 = sand.u32 %s77, 1
        %s295 = smul.addr %s294, 384
        %s296 = scalar_lea.vmem [#allocation5], %s295
        %p297 = pneg %p90
        %p298 = pneg %p87
        %p299 = pneg %p111
        %p300 = pneg %p108
        %p301 = pneg %p132
        %p302 = pneg %p129
        %p303 = pneg %p160
        %p304 = pneg %p157
        %s305 = sand.u32 %s147, 1
        %s306 = scalar_lea.sflag [#allocation4], %s305
        %s307 = sand.u32 %s147, 1
        %s308 = smul.addr %s307, 512
        %s309 = scalar_lea.vmem [#allocation10], %s308
        %s310 = smul.u32 16, %s30
        %s311 = sadd.s32 %s30, 1
        %s312 = smul.u32 16, %s311
        %s313 = smul.u32 16, %s30
        %v314 = vld [vmem:[%s263] sm:$0xff]
        %v315 = vld [vmem:[%s263 + $0x8] sm:$0xff]
        %v316 = vld [vmem:[%s263 + $0x10] sm:$0x1]
        %v317 = vld [vmem:[%s263 + $0x18] sm:$0xff]
        %v318 = vld [vmem:[%s263 + $0x20] sm:$0xff]
        %v319 = vld [vmem:[%s263 + $0x28] sm:$0x1]
        %v320 = vld [vmem:[%s263 + $0x30] sm:$0xff]
        %v321 = vld [vmem:[%s263 + $0x38] sm:$0xff]
        %v322 = vld [vmem:[%s263 + $0x40] sm:$0x1]
        %v323 = vld [vmem:[%s263 + $0x48] sm:$0xff]
        %v324 = vld [vmem:[%s263 + $0x50] sm:$0xff]
        %v325 = vld [vmem:[%s263 + $0x58] sm:$0x1]
        %v326 = vld [vmem:[%s263 + $0x60] sm:$0xff]
        %v327 = vld [vmem:[%s263 + $0x68] sm:$0xff]
        %v328 = vld [vmem:[%s263 + $0x70] sm:$0x1]
        %v329 = vld [vmem:[%s263 + $0x78] sm:$0xff]
        %v330 = vld [vmem:[%s263 + $0x80] sm:$0xff]
        %v331 = vld [vmem:[%s263 + $0x88] sm:$0x1]
        %v332 = vld [vmem:[%s263 + $0x90] sm:$0xff]
        %v333 = vld [vmem:[%s263 + $0x98] sm:$0xff]
        %v334 = vld [vmem:[%s263 + $0xa0] sm:$0x1]
        %v335 = vld [vmem:[%s263 + $0xa8] sm:$0xff]
        %v336 = vld [vmem:[%s263 + $0xb0] sm:$0xff]
        %v337 = vld [vmem:[%s263 + $0xb8] sm:$0x1]
        %v338 = vld [vmem:[%s263 + $0xc0] sm:$0xff]
        %v339 = vld [vmem:[%s263 + $0xc8] sm:$0xff]
        %v340 = vld [vmem:[%s263 + $0xd0] sm:$0x1]
        %v341 = vld [vmem:[%s263 + $0xd8] sm:$0xff]
        %v342 = vld [vmem:[%s263 + $0xe0] sm:$0xff]
        %v343 = vld [vmem:[%s263 + $0xe8] sm:$0x1]
        %v344 = vld [vmem:[%s263 + $0xf0] sm:$0xff]
        %v345 = vld [vmem:[%s263 + $0xf8] sm:$0xff]
        %v346 = vld [vmem:[%s263 + $0x100] sm:$0x1]
        %v347 = vld [vmem:[%s263 + $0x108] sm:$0xff]
        %v348 = vld [vmem:[%s263 + $0x110] sm:$0xff]
        %v349 = vld [vmem:[%s263 + $0x118] sm:$0x1]
        %v350 = vld [vmem:[%s263 + $0x120] sm:$0xff]
        %v351 = vld [vmem:[%s263 + $0x128] sm:$0xff]
        %v352 = vld [vmem:[%s263 + $0x130] sm:$0x1]
        %v353 = vld [vmem:[%s263 + $0x138] sm:$0xff]
        %v354 = vld [vmem:[%s263 + $0x140] sm:$0xff]
        %v355 = vld [vmem:[%s263 + $0x148] sm:$0x1]
        %v356 = vld [vmem:[%s263 + $0x150] sm:$0xff]
        %v357 = vld [vmem:[%s263 + $0x158] sm:$0xff]
        %v358 = vld [vmem:[%s263 + $0x160] sm:$0x1]
        %v359 = vld [vmem:[%s263 + $0x168] sm:$0xff]
        %v360 = vld [vmem:[%s263 + $0x170] sm:$0xff]
        %v361 = vld [vmem:[%s263 + $0x178] sm:$0x1]
        %v362 = vld [vmem:[%s272] sm:$0xff]
        %v363 = vld [vmem:[%s272 + $0x8] sm:$0xff]
        %v364 = vld [vmem:[%s272 + $0x10] sm:$0x1]
        %v365 = vld [vmem:[#allocation8] sm:$0x1]
        %v366 = vld [vmem:[#allocation7] sm:$0xf]
        %vm415 = vcmask 1046528
        %v416 = vrot.slane %v314, 1
        %v417 = vrot.slane %v315, 1
        %v418 = vsel %vm415, %v416, %v417
        %v419 = vrot.slane %v316, 1
        %v420 = vsel %vm415, %v417, %v419
        %v421 = vrot.slane %v317, 1
        %v422 = vrot.slane %v318, 1
        %v423 = vsel %vm415, %v421, %v422
        %v424 = vrot.slane %v319, 1
        %v425 = vsel %vm415, %v422, %v424
        %v426 = vrot.slane %v320, 1
        %v427 = vrot.slane %v321, 1
        %v428 = vsel %vm415, %v426, %v427
        %v429 = vrot.slane %v322, 1
        %v430 = vsel %vm415, %v427, %v429
        %v431 = vrot.slane %v323, 1
        %v432 = vrot.slane %v324, 1
        %v433 = vsel %vm415, %v431, %v432
        %v434 = vrot.slane %v325, 1
        %v435 = vsel %vm415, %v432, %v434
        %v436 = vrot.slane %v326, 1
        %v437 = vrot.slane %v327, 1
        %v438 = vsel %vm415, %v436, %v437
        %v439 = vrot.slane %v328, 1
        %v440 = vsel %vm415, %v437, %v439
        %v441 = vrot.slane %v329, 1
        %v442 = vrot.slane %v330, 1
        %v443 = vsel %vm415, %v441, %v442
        %v444 = vrot.slane %v331, 1
        %v445 = vsel %vm415, %v442, %v444
        %v446 = vrot.slane %v332, 1
        %v447 = vrot.slane %v333, 1
        %v448 = vsel %vm415, %v446, %v447
        %v449 = vrot.slane %v334, 1
        %v450 = vsel %vm415, %v447, %v449
        %v451 = vrot.slane %v335, 1
        %v452 = vrot.slane %v336, 1
        %v453 = vsel %vm415, %v451, %v452
        %v454 = vrot.slane %v337, 1
        %v455 = vsel %vm415, %v452, %v454
        %v456 = vrot.slane %v338, 1
        %v457 = vrot.slane %v339, 1
        %v458 = vsel %vm415, %v456, %v457
        %v459 = vrot.slane %v340, 1
        %v460 = vsel %vm415, %v457, %v459
        %v461 = vrot.slane %v341, 1
        %v462 = vrot.slane %v342, 1
        %v463 = vsel %vm415, %v461, %v462
        %v464 = vrot.slane %v343, 1
        %v465 = vsel %vm415, %v462, %v464
        %v466 = vrot.slane %v344, 1
        %v467 = vrot.slane %v345, 1
        %v468 = vsel %vm415, %v466, %v467
        %v469 = vrot.slane %v346, 1
        %v470 = vsel %vm415, %v467, %v469
        %v471 = vrot.slane %v347, 1
        %v472 = vrot.slane %v348, 1
        %v473 = vsel %vm415, %v471, %v472
        %v474 = vrot.slane %v349, 1
        %v475 = vsel %vm415, %v472, %v474
        %v476 = vrot.slane %v350, 1
        %v477 = vrot.slane %v351, 1
        %v478 = vsel %vm415, %v476, %v477
        %v479 = vrot.slane %v352, 1
        %v480 = vsel %vm415, %v477, %v479
        %v481 = vrot.slane %v353, 1
        %v482 = vrot.slane %v354, 1
        %v483 = vsel %vm415, %v481, %v482
        %v484 = vrot.slane %v355, 1
        %v485 = vsel %vm415, %v482, %v484
        %v486 = vrot.slane %v356, 1
        %v487 = vrot.slane %v357, 1
        %v488 = vsel %vm415, %v486, %v487
        %v489 = vrot.slane %v358, 1
        %v490 = vsel %vm415, %v487, %v489
        %v491 = vrot.slane %v359, 1
        %v492 = vrot.slane %v360, 1
        %v493 = vsel %vm415, %v491, %v492
        %v494 = vrot.slane %v361, 1
        %v495 = vsel %vm415, %v492, %v494
        %s496 = scalar_lea.vmem [#allocation7], 4
        %v497 = vld [vmem:[%s496] sm:$0xf]
        %vm498 = vcmask 31744
        %v499 = vsel %vm498, %v418, 0
        %v501 = vsel %vm498, %v420, 0
        %v503 = vsel %vm498, %v423, 0
        %v505 = vsel %vm498, %v425, 0
        %v507 = vsel %vm498, %v428, 0
        %v509 = vsel %vm498, %v430, 0
        %v511 = vsel %vm498, %v433, 0
        %v513 = vsel %vm498, %v435, 0
        %v515 = vsel %vm498, %v438, 0
        %v517 = vsel %vm498, %v440, 0
        %v519 = vsel %vm498, %v443, 0
        %v521 = vsel %vm498, %v445, 0
        %v523 = vsel %vm498, %v448, 0
        %v525 = vsel %vm498, %v450, 0
        %v527 = vsel %vm498, %v453, 0
        %v529 = vsel %vm498, %v455, 0
        %v531 = vsel %vm498, %v458, 0
        %v533 = vsel %vm498, %v460, 0
        %v535 = vsel %vm498, %v463, 0
        %v537 = vsel %vm498, %v465, 0
        %v539 = vsel %vm498, %v468, 0
        %v541 = vsel %vm498, %v470, 0
        %v543 = vsel %vm498, %v473, 0
        %v545 = vsel %vm498, %v475, 0
        %v547 = vsel %vm498, %v478, 0
        %v549 = vsel %vm498, %v480, 0
        %v551 = vsel %vm498, %v483, 0
        %v553 = vsel %vm498, %v485, 0
        %v555 = vsel %vm498, %v488, 0
        %v557 = vsel %vm498, %v490, 0
        %v559 = vsel %vm498, %v493, 0
        %v561 = vsel %vm498, %v495, 0
        %vm563 = vcmask 1043456
        %v565 = vsel %vm563, %v497, 0
        %567 = vmatprep.subr.mxu0 0.0
        %568 = vmatpush1.msra.mxu0 %v565
        %569 = vmatprep.subr.mxu0 0.0
        %570 = vmatpush1.msra.mxu0 0.0
        %571 = vmatprep.subr.mxu0 0.0
        %572 = vmatpush1.msra.mxu0 0.0
        %573 = vmatprep.subr.mxu0 0.0
        %574 = vmatpush1.msra.mxu0 0.0
        %575 = vmatprep.subr.mxu0 0.0
        %576 = vmatpush1.msra.mxu0 0.0
        %577 = vmatprep.subr.mxu0 0.0
        %578 = vmatpush1.msra.mxu0 0.0
        %579 = vmatprep.subr.mxu0 0.0
        %580 = vmatpush1.msra.mxu0 0.0
        %581 = vmatprep.subr.mxu0 0.0
        %582 = vmatpush1.msra.mxu0 0.0
        %583 = vmatprep.subr.mxu0 0.0
        %584 = vmatpush1.msra.mxu0 0.0
        %585 = vmatprep.subr.mxu0 0.0
        %586 = vmatpush1.msra.mxu0 0.0
        %587 = vmatprep.subr.mxu0 0.0
        %588 = vmatpush1.msra.mxu0 0.0
        %589 = vmatprep.subr.mxu0 0.0
        %590 = vmatpush1.msra.mxu0 0.0
        %591 = vmatprep.subr.mxu0 0.0
        %592 = vmatpush1.msra.mxu0 0.0
        %593 = vmatprep.subr.mxu0 0.0
        %594 = vmatpush1.msra.mxu0 0.0
        %595 = vmatprep.subr.mxu0 0.0
        %596 = vmatpush1.msra.mxu0 0.0
        %597 = vmatprep.subr.mxu0 0.0
        %598 = vmatpush1.msra.mxu0 0.0
        %599 = vmatprep.subr.mxu0 0.0
        %600 = vmatpush1.msra.mxu0 0.0
        %601 = vmatprep.subr.mxu0 0.0
        %602 = vmatpush1.msra.mxu0 0.0
        %603 = vmatprep.subr.mxu0 0.0
        %604 = vmatpush1.msra.mxu0 0.0
        %605 = vmatprep.subr.mxu0 0.0
        %606 = vmatpush1.msra.mxu0 0.0
        %607 = vmatprep.subr.mxu0 0.0
        %608 = vmatpush1.msra.mxu0 0.0
        %609 = vmatprep.subr.mxu0 0.0
        %610 = vmatpush1.msra.mxu0 0.0
        %611 = vmatprep.subr.mxu0 0.0
        %612 = vmatpush1.msra.mxu0 0.0
        %613 = vmatprep.subr.mxu0 0.0
        %614 = vmatpush1.msra.mxu0 0.0
        %615 = vmatprep.subr.mxu0 0.0
        %616 = vmatpush1.msra.mxu0 0.0
        %617 = vmatprep.subr.mxu0 0.0
        %618 = vmatpush1.msra.mxu0 0.0
        %619 = vmatprep.subr.mxu0 0.0
        %620 = vmatpush1.msra.mxu0 0.0
        %621 = vmatprep.subr.mxu0 0.0
        %622 = vmatpush1.msra.mxu0 0.0
        %623 = vmatprep.subr.mxu0 0.0
        %624 = vmatpush1.msra.mxu0 0.0
        %625 = vmatprep.subr.mxu0 0.0
        %626 = vmatpush1.msra.mxu0 0.0
        %627 = vmatprep.subr.mxu0 0.0
        %628 = vmatpush1.msra.mxu0 0.0
        %629 = vmatprep.subr.mxu0 0.0
        %630 = vmatpush1.msra.mxu0 0.0
        %631 = vmatprep.mubr.f32.mxu0 0.0
        %632 = vmatmul.mubr.f32.gmra.mrb[0].mxu0 %v499
        %v633 = vpop.f32.mrb[0].mxu0
        %v634 = vadd.f32 0.0, %v633
        %v635 = vpop.f32.mrb[0].mxu0
        %636 = vmatprep.mubr.f32.mxu0 0.0
        %637 = vmatmul.mubr.f32.gmra.mrb[0].mxu0 %v501
        %v638 = vpop.f32.mrb[0].mxu0
        %v639 = vadd.f32 0.0, %v638
        %v640 = vpop.f32.mrb[0].mxu0
        %641 = vmatprep.mubr.f32.mxu0 0.0
        %642 = vmatmul.mubr.f32.gmra.mrb[0].mxu0 %v503
        %v643 = vpop.f32.mrb[0].mxu0
        %v644 = vadd.f32 0.0, %v643
        %v645 = vpop.f32.mrb[0].mxu0
        %646 = vmatprep.mubr.f32.mxu0 0.0
        %647 = vmatmul.mubr.f32.gmra.mrb[0].mxu0 %v505
        %v648 = vpop.f32.mrb[0].mxu0
        %v649 = vadd.f32 0.0, %v648
        %v650 = vpop.f32.mrb[0].mxu0
        %651 = vmatprep.mubr.f32.mxu0 0.0
        %652 = vmatmul.mubr.f32.gmra.mrb[0].mxu0 %v507
        %v653 = vpop.f32.mrb[0].mxu0
        %v654 = vadd.f32 0.0, %v653
        %v655 = vpop.f32.mrb[0].mxu0
        %656 = vmatprep.mubr.f32.mxu0 0.0
        %657 = vmatmul.mubr.f32.gmra.mrb[0].mxu0 %v509
        %v658 = vpop.f32.mrb[0].mxu0
        %v659 = vadd.f32 0.0, %v658
        %v660 = vpop.f32.mrb[0].mxu0
        %661 = vmatprep.mubr.f32.mxu0 0.0
        %662 = vmatmul.mubr.f32.gmra.mrb[0].mxu0 %v511
        %v663 = vpop.f32.mrb[0].mxu0
        %v664 = vadd.f32 0.0, %v663
        %v665 = vpop.f32.mrb[0].mxu0
        %666 = vmatprep.mubr.f32.mxu0 0.0
        %667 = vmatmul.mubr.f32.gmra.mrb[0].mxu0 %v513
        %v668 = vpop.f32.mrb[0].mxu0
        %v669 = vadd.f32 0.0, %v668
        %v670 = vpop.f32.mrb[0].mxu0
        %671 = vmatprep.mubr.f32.mxu0 0.0
        %672 = vmatmul.mubr.f32.gmra.mrb[0].mxu0 %v515
        %v673 = vpop.f32.mrb[0].mxu0
        %v674 = vadd.f32 0.0, %v673
        %v675 = vpop.f32.mrb[0].mxu0
        %676 = vmatprep.mubr.f32.mxu0 0.0
        %677 = vmatmul.mubr.f32.gmra.mrb[0].mxu0 %v517
        %v678 = vpop.f32.mrb[0].mxu0
        %v679 = vadd.f32 0.0, %v678
        %v680 = vpop.f32.mrb[0].mxu0
        %681 = vmatprep.mubr.f32.mxu0 0.0
        %682 = vmatmul.mubr.f32.gmra.mrb[0].mxu0 %v519
        %v683 = vpop.f32.mrb[0].mxu0
        %v684 = vadd.f32 0.0, %v683
        %v685 = vpop.f32.mrb[0].mxu0
        %686 = vmatprep.mubr.f32.mxu0 0.0
        %687 = vmatmul.mubr.f32.gmra.mrb[0].mxu0 %v521
        %v688 = vpop.f32.mrb[0].mxu0
        %v689 = vadd.f32 0.0, %v688
        %v690 = vpop.f32.mrb[0].mxu0
        %691 = vmatprep.mubr.f32.mxu0 0.0
        %692 = vmatmul.mubr.f32.gmra.mrb[0].mxu0 %v523
        %v693 = vpop.f32.mrb[0].mxu0
        %v694 = vadd.f32 0.0, %v693
        %v695 = vpop.f32.mrb[0].mxu0
        %696 = vmatprep.mubr.f32.mxu0 0.0
        %697 = vmatmul.mubr.f32.gmra.mrb[0].mxu0 %v525
        %v698 = vpop.f32.mrb[0].mxu0
        %v699 = vadd.f32 0.0, %v698
        %v700 = vpop.f32.mrb[0].mxu0
        %701 = vmatprep.mubr.f32.mxu0 0.0
        %702 = vmatmul.mubr.f32.gmra.mrb[0].mxu0 %v527
        %v703 = vpop.f32.mrb[0].mxu0
        %v704 = vadd.f32 0.0, %v703
        %v705 = vpop.f32.mrb[0].mxu0
        %706 = vmatprep.mubr.f32.mxu0 0.0
        %707 = vmatmul.mubr.f32.gmra.mrb[0].mxu0 %v529
        %v708 = vpop.f32.mrb[0].mxu0
        %v709 = vadd.f32 0.0, %v708
        %v710 = vpop.f32.mrb[0].mxu0
        %711 = vmatprep.mubr.f32.mxu0 0.0
        %712 = vmatmul.mubr.f32.gmra.mrb[0].mxu0 %v531
        %v713 = vpop.f32.mrb[0].mxu0
        %v714 = vadd.f32 0.0, %v713
        %v715 = vpop.f32.mrb[0].mxu0
        %716 = vmatprep.mubr.f32.mxu0 0.0
        %717 = vmatmul.mubr.f32.gmra.mrb[0].mxu0 %v533
        %v718 = vpop.f32.mrb[0].mxu0
        %v719 = vadd.f32 0.0, %v718
        %v720 = vpop.f32.mrb[0].mxu0
        %721 = vmatprep.mubr.f32.mxu0 0.0
        %722 = vmatmul.mubr.f32.gmra.mrb[0].mxu0 %v535
        %v723 = vpop.f32.mrb[0].mxu0
        %v724 = vadd.f32 0.0, %v723
        %v725 = vpop.f32.mrb[0].mxu0
        %726 = vmatprep.mubr.f32.mxu0 0.0
        %727 = vmatmul.mubr.f32.gmra.mrb[0].mxu0 %v537
        %v728 = vpop.f32.mrb[0].mxu0
        %v729 = vadd.f32 0.0, %v728
        %v730 = vpop.f32.mrb[0].mxu0
        %731 = vmatprep.mubr.f32.mxu0 0.0
        %732 = vmatmul.mubr.f32.gmra.mrb[0].mxu0 %v539
        %v733 = vpop.f32.mrb[0].mxu0
        %v734 = vadd.f32 0.0, %v733
        %v735 = vpop.f32.mrb[0].mxu0
        %736 = vmatprep.mubr.f32.mxu0 0.0
        %737 = vmatmul.mubr.f32.gmra.mrb[0].mxu0 %v541
        %v738 = vpop.f32.mrb[0].mxu0
        %v739 = vadd.f32 0.0, %v738
        %v740 = vpop.f32.mrb[0].mxu0
        %741 = vmatprep.mubr.f32.mxu0 0.0
        %742 = vmatmul.mubr.f32.gmra.mrb[0].mxu0 %v543
        %v743 = vpop.f32.mrb[0].mxu0
        %v744 = vadd.f32 0.0, %v743
        %v745 = vpop.f32.mrb[0].mxu0
        %746 = vmatprep.mubr.f32.mxu0 0.0
        %747 = vmatmul.mubr.f32.gmra.mrb[0].mxu0 %v545
        %v748 = vpop.f32.mrb[0].mxu0
        %v749 = vadd.f32 0.0, %v748
        %v750 = vpop.f32.mrb[0].mxu0
        %751 = vmatprep.mubr.f32.mxu0 0.0
        %752 = vmatmul.mubr.f32.gmra.mrb[0].mxu0 %v547
        %v753 = vpop.f32.mrb[0].mxu0
        %v754 = vadd.f32 0.0, %v753
        %v755 = vpop.f32.mrb[0].mxu0
        %756 = vmatprep.mubr.f32.mxu0 0.0
        %757 = vmatmul.mubr.f32.gmra.mrb[0].mxu0 %v549
        %v758 = vpop.f32.mrb[0].mxu0
        %v759 = vadd.f32 0.0, %v758
        %v760 = vpop.f32.mrb[0].mxu0
        %761 = vmatprep.mubr.f32.mxu0 0.0
        %762 = vmatmul.mubr.f32.gmra.mrb[0].mxu0 %v551
        %v763 = vpop.f32.mrb[0].mxu0
        %v764 = vadd.f32 0.0, %v763
        %v765 = vpop.f32.mrb[0].mxu0
        %766 = vmatprep.mubr.f32.mxu0 0.0
        %767 = vmatmul.mubr.f32.gmra.mrb[0].mxu0 %v553
        %v768 = vpop.f32.mrb[0].mxu0
        %v769 = vadd.f32 0.0, %v768
        %v770 = vpop.f32.mrb[0].mxu0
        %771 = vmatprep.mubr.f32.mxu0 0.0
        %772 = vmatmul.mubr.f32.gmra.mrb[0].mxu0 %v555
        %v773 = vpop.f32.mrb[0].mxu0
        %v774 = vadd.f32 0.0, %v773
        %v775 = vpop.f32.mrb[0].mxu0
        %776 = vmatprep.mubr.f32.mxu0 0.0
        %777 = vmatmul.mubr.f32.gmra.mrb[0].mxu0 %v557
        %v778 = vpop.f32.mrb[0].mxu0
        %v779 = vadd.f32 0.0, %v778
        %v780 = vpop.f32.mrb[0].mxu0
        %781 = vmatprep.mubr.f32.mxu0 0.0
        %782 = vmatmul.mubr.f32.gmra.mrb[0].mxu0 %v559
        %v783 = vpop.f32.mrb[0].mxu0
        %v784 = vadd.f32 0.0, %v783
        %v785 = vpop.f32.mrb[0].mxu0
        %786 = vmatprep.mubr.f32.mxu0 0.0
        %787 = vmatmul.mubr.f32.gmra.mrb[0].mxu0 %v561
        %v788 = vpop.f32.mrb[0].mxu0
        %v789 = vadd.f32 0.0, %v788
        %v790 = vpop.f32.mrb[0].mxu0
        %791 = vdwg.mxu0
        %v792 = vsel %vm498, %v314, 0
        %v794 = vsel %vm498, %v315, 0
        %v796 = vsel %vm498, %v317, 0
        %v798 = vsel %vm498, %v318, 0
        %v800 = vsel %vm498, %v320, 0
        %v802 = vsel %vm498, %v321, 0
        %v804 = vsel %vm498, %v323, 0
        %v806 = vsel %vm498, %v324, 0
        %v808 = vsel %vm498, %v326, 0
        %v810 = vsel %vm498, %v327, 0
        %v812 = vsel %vm498, %v329, 0
        %v814 = vsel %vm498, %v330, 0
        %v816 = vsel %vm498, %v332, 0
        %v818 = vsel %vm498, %v333, 0
        %v820 = vsel %vm498, %v335, 0
        %v822 = vsel %vm498, %v336, 0
        %v824 = vsel %vm498, %v338, 0
        %v826 = vsel %vm498, %v339, 0
        %v828 = vsel %vm498, %v341, 0
        %v830 = vsel %vm498, %v342, 0
        %v832 = vsel %vm498, %v344, 0
        %v834 = vsel %vm498, %v345, 0
        %v836 = vsel %vm498, %v347, 0
        %v838 = vsel %vm498, %v348, 0
        %v840 = vsel %vm498, %v350, 0
        %v842 = vsel %vm498, %v351, 0
        %v844 = vsel %vm498, %v353, 0
        %v846 = vsel %vm498, %v354, 0
        %v848 = vsel %vm498, %v356, 0
        %v850 = vsel %vm498, %v357, 0
        %v852 = vsel %vm498, %v359, 0
        %v854 = vsel %vm498, %v360, 0
        %v857 = vsel %vm563, %v366, 0
        %859 = vmatprep.subr.mxu0 0.0
        %860 = vmatpush1.msra.mxu0 %v857
        %861 = vmatprep.subr.mxu0 0.0
        %862 = vmatpush1.msra.mxu0 0.0
        %863 = vmatprep.subr.mxu0 0.0
        %864 = vmatpush1.msra.mxu0 0.0
        %865 = vmatprep.subr.mxu0 0.0
        %866 = vmatpush1.msra.mxu0 0.0
        %867 = vmatprep.subr.mxu0 0.0
        %868 = vmatpush1.msra.mxu0 0.0
        %869 = vmatprep.subr.mxu0 0.0
        %870 = vmatpush1.msra.mxu0 0.0
        %871 = vmatprep.subr.mxu0 0.0
        %872 = vmatpush1.msra.mxu0 0.0
        %873 = vmatprep.subr.mxu0 0.0
        %874 = vmatpush1.msra.mxu0 0.0
        %875 = vmatprep.subr.mxu0 0.0
        %876 = vmatpush1.msra.mxu0 0.0
        %877 = vmatprep.subr.mxu0 0.0
        %878 = vmatpush1.msra.mxu0 0.0
        %879 = vmatprep.subr.mxu0 0.0
        %880 = vmatpush1.msra.mxu0 0.0
        %881 = vmatprep.subr.mxu0 0.0
        %882 = vmatpush1.msra.mxu0 0.0
        %883 = vmatprep.subr.mxu0 0.0
        %884 = vmatpush1.msra.mxu0 0.0
        %885 = vmatprep.subr.mxu0 0.0
        %886 = vmatpush1.msra.mxu0 0.0
        %887 = vmatprep.subr.mxu0 0.0
        %888 = vmatpush1.msra.mxu0 0.0
        %889 = vmatprep.subr.mxu0 0.0
        %890 = vmatpush1.msra.mxu0 0.0
        %891 = vmatprep.subr.mxu0 0.0
        %892 = vmatpush1.msra.mxu0 0.0
        %893 = vmatprep.subr.mxu0 0.0
        %894 = vmatpush1.msra.mxu0 0.0
        %895 = vmatprep.subr.mxu0 0.0
        %896 = vmatpush1.msra.mxu0 0.0
        %897 = vmatprep.subr.mxu0 0.0
        %898 = vmatpush1.msra.mxu0 0.0
        %899 = vmatprep.subr.mxu0 0.0
        %900 = vmatpush1.msra.mxu0 0.0
        %901 = vmatprep.subr.mxu0 0.0
        %902 = vmatpush1.msra.mxu0 0.0
        %903 = vmatprep.subr.mxu0 0.0
        %904 = vmatpush1.msra.mxu0 0.0
        %905 = vmatprep.subr.mxu0 0.0
        %906 = vmatpush1.msra.mxu0 0.0
        %907 = vmatprep.subr.mxu0 0.0
        %908 = vmatpush1.msra.mxu0 0.0
        %909 = vmatprep.subr.mxu0 0.0
        %910 = vmatpush1.msra.mxu0 0.0
        %911 = vmatprep.subr.mxu0 0.0
        %912 = vmatpush1.msra.mxu0 0.0
        %913 = vmatprep.subr.mxu0 0.0
        %914 = vmatpush1.msra.mxu0 0.0
        %915 = vmatprep.subr.mxu0 0.0
        %916 = vmatpush1.msra.mxu0 0.0
        %917 = vmatprep.subr.mxu0 0.0
        %918 = vmatpush1.msra.mxu0 0.0
        %919 = vmatprep.subr.mxu0 0.0
        %920 = vmatpush1.msra.mxu0 0.0
        %921 = vmatprep.subr.mxu0 0.0
        %922 = vmatpush1.msra.mxu0 0.0
        %923 = vmatprep.mubr.f32.mxu0 0.0
        %924 = vmatmul.mubr.f32.gmra.mrb[0].mxu0 %v792
        %v925 = vpop.f32.mrb[0].mxu0
        %v926 = vadd.f32 %v634, %v925
        %v927 = vpop.f32.mrb[0].mxu0
        %928 = vmatprep.mubr.f32.mxu0 0.0
        %929 = vmatmul.mubr.f32.gmra.mrb[0].mxu0 %v794
        %v930 = vpop.f32.mrb[0].mxu0
        %v931 = vadd.f32 %v639, %v930
        %v932 = vpop.f32.mrb[0].mxu0
        %933 = vmatprep.mubr.f32.mxu0 0.0
        %934 = vmatmul.mubr.f32.gmra.mrb[0].mxu0 %v796
        %v935 = vpop.f32.mrb[0].mxu0
        %v936 = vadd.f32 %v644, %v935
        %v937 = vpop.f32.mrb[0].mxu0
        %938 = vmatprep.mubr.f32.mxu0 0.0
        %939 = vmatmul.mubr.f32.gmra.mrb[0].mxu0 %v798
        %v940 = vpop.f32.mrb[0].mxu0
        %v941 = vadd.f32 %v649, %v940
        %v942 = vpop.f32.mrb[0].mxu0
        %943 = vmatprep.mubr.f32.mxu0 0.0
        %944 = vmatmul.mubr.f32.gmra.mrb[0].mxu0 %v800
        %v945 = vpop.f32.mrb[0].mxu0
        %v946 = vadd.f32 %v654, %v945
        %v947 = vpop.f32.mrb[0].mxu0
        %948 = vmatprep.mubr.f32.mxu0 0.0
        %949 = vmatmul.mubr.f32.gmra.mrb[0].mxu0 %v802
        %v950 = vpop.f32.mrb[0].mxu0
        %v951 = vadd.f32 %v659, %v950
        %v952 = vpop.f32.mrb[0].mxu0
        %953 = vmatprep.mubr.f32.mxu0 0.0
        %954 = vmatmul.mubr.f32.gmra.mrb[0].mxu0 %v804
        %v955 = vpop.f32.mrb[0].mxu0
        %v956 = vadd.f32 %v664, %v955
        %v957 = vpop.f32.mrb[0].mxu0
        %958 = vmatprep.mubr.f32.mxu0 0.0
        %959 = vmatmul.mubr.f32.gmra.mrb[0].mxu0 %v806
        %v960 = vpop.f32.mrb[0].mxu0
        %v961 = vadd.f32 %v669, %v960
        %v962 = vpop.f32.mrb[0].mxu0
        %963 = vmatprep.mubr.f32.mxu0 0.0
        %964 = vmatmul.mubr.f32.gmra.mrb[0].mxu0 %v808
        %v965 = vpop.f32.mrb[0].mxu0
        %v966 = vadd.f32 %v674, %v965
        %v967 = vpop.f32.mrb[0].mxu0
        %968 = vmatprep.mubr.f32.mxu0 0.0
        %969 = vmatmul.mubr.f32.gmra.mrb[0].mxu0 %v810
        %v970 = vpop.f32.mrb[0].mxu0
        %v971 = vadd.f32 %v679, %v970
        %v972 = vpop.f32.mrb[0].mxu0
        %973 = vmatprep.mubr.f32.mxu0 0.0
        %974 = vmatmul.mubr.f32.gmra.mrb[0].mxu0 %v812
        %v975 = vpop.f32.mrb[0].mxu0
        %v976 = vadd.f32 %v684, %v975
        %v977 = vpop.f32.mrb[0].mxu0
        %978 = vmatprep.mubr.f32.mxu0 0.0
        %979 = vmatmul.mubr.f32.gmra.mrb[0].mxu0 %v814
        %v980 = vpop.f32.mrb[0].mxu0
        %v981 = vadd.f32 %v689, %v980
        %v982 = vpop.f32.mrb[0].mxu0
        %983 = vmatprep.mubr.f32.mxu0 0.0
        %984 = vmatmul.mubr.f32.gmra.mrb[0].mxu0 %v816
        %v985 = vpop.f32.mrb[0].mxu0
        %v986 = vadd.f32 %v694, %v985
        %v987 = vpop.f32.mrb[0].mxu0
        %988 = vmatprep.mubr.f32.mxu0 0.0
        %989 = vmatmul.mubr.f32.gmra.mrb[0].mxu0 %v818
        %v990 = vpop.f32.mrb[0].mxu0
        %v991 = vadd.f32 %v699, %v990
        %v992 = vpop.f32.mrb[0].mxu0
        %993 = vmatprep.mubr.f32.mxu0 0.0
        %994 = vmatmul.mubr.f32.gmra.mrb[0].mxu0 %v820
        %v995 = vpop.f32.mrb[0].mxu0
        %v996 = vadd.f32 %v704, %v995
        %v997 = vpop.f32.mrb[0].mxu0
        %998 = vmatprep.mubr.f32.mxu0 0.0
        %999 = vmatmul.mubr.f32.gmra.mrb[0].mxu0 %v822
        %v1000 = vpop.f32.mrb[0].mxu0
        %v1001 = vadd.f32 %v709, %v1000
        %v1002 = vpop.f32.mrb[0].mxu0
        %1003 = vmatprep.mubr.f32.mxu0 0.0
        %1004 = vmatmul.mubr.f32.gmra.mrb[0].mxu0 %v824
        %v1005 = vpop.f32.mrb[0].mxu0
        %v1006 = vadd.f32 %v714, %v1005
        %v1007 = vpop.f32.mrb[0].mxu0
        %1008 = vmatprep.mubr.f32.mxu0 0.0
        %1009 = vmatmul.mubr.f32.gmra.mrb[0].mxu0 %v826
        %v1010 = vpop.f32.mrb[0].mxu0
        %v1011 = vadd.f32 %v719, %v1010
        %v1012 = vpop.f32.mrb[0].mxu0
        %1013 = vmatprep.mubr.f32.mxu0 0.0
        %1014 = vmatmul.mubr.f32.gmra.mrb[0].mxu0 %v828
        %v1015 = vpop.f32.mrb[0].mxu0
        %v1016 = vadd.f32 %v724, %v1015
        %v1017 = vpop.f32.mrb[0].mxu0
        %1018 = vmatprep.mubr.f32.mxu0 0.0
        %1019 = vmatmul.mubr.f32.gmra.mrb[0].mxu0 %v830
        %v1020 = vpop.f32.mrb[0].mxu0
        %v1021 = vadd.f32 %v729, %v1020
        %v1022 = vpop.f32.mrb[0].mxu0
        %1023 = vmatprep.mubr.f32.mxu0 0.0
        %1024 = vmatmul.mubr.f32.gmra.mrb[0].mxu0 %v832
        %v1025 = vpop.f32.mrb[0].mxu0
        %v1026 = vadd.f32 %v734, %v1025
        %v1027 = vpop.f32.mrb[0].mxu0
        %1028 = vmatprep.mubr.f32.mxu0 0.0
        %1029 = vmatmul.mubr.f32.gmra.mrb[0].mxu0 %v834
        %v1030 = vpop.f32.mrb[0].mxu0
        %v1031 = vadd.f32 %v739, %v1030
        %v1032 = vpop.f32.mrb[0].mxu0
        %1033 = vmatprep.mubr.f32.mxu0 0.0
        %1034 = vmatmul.mubr.f32.gmra.mrb[0].mxu0 %v836
        %v1035 = vpop.f32.mrb[0].mxu0
        %v1036 = vadd.f32 %v744, %v1035
        %v1037 = vpop.f32.mrb[0].mxu0
        %1038 = vmatprep.mubr.f32.mxu0 0.0
        %1039 = vmatmul.mubr.f32.gmra.mrb[0].mxu0 %v838
        %v1040 = vpop.f32.mrb[0].mxu0
        %v1041 = vadd.f32 %v749, %v1040
        %v1042 = vpop.f32.mrb[0].mxu0
        %1043 = vmatprep.mubr.f32.mxu0 0.0
        %1044 = vmatmul.mubr.f32.gmra.mrb[0].mxu0 %v840
        %v1045 = vpop.f32.mrb[0].mxu0
        %v1046 = vadd.f32 %v754, %v1045
        %v1047 = vpop.f32.mrb[0].mxu0
        %1048 = vmatprep.mubr.f32.mxu0 0.0
        %1049 = vmatmul.mubr.f32.gmra.mrb[0].mxu0 %v842
        %v1050 = vpop.f32.mrb[0].mxu0
        %v1051 = vadd.f32 %v759, %v1050
        %v1052 = vpop.f32.mrb[0].mxu0
        %1053 = vmatprep.mubr.f32.mxu0 0.0
        %1054 = vmatmul.mubr.f32.gmra.mrb[0].mxu0 %v844
        %v1055 = vpop.f32.mrb[0].mxu0
        %v1056 = vadd.f32 %v764, %v1055
        %v1057 = vpop.f32.mrb[0].mxu0
        %1058 = vmatprep.mubr.f32.mxu0 0.0
        %1059 = vmatmul.mubr.f32.gmra.mrb[0].mxu0 %v846
        %v1060 = vpop.f32.mrb[0].mxu0
        %v1061 = vadd.f32 %v769, %v1060
        %v1062 = vpop.f32.mrb[0].mxu0
        %1063 = vmatprep.mubr.f32.mxu0 0.0
        %1064 = vmatmul.mubr.f32.gmra.mrb[0].mxu0 %v848
        %v1065 = vpop.f32.mrb[0].mxu0
        %v1066 = vadd.f32 %v774, %v1065
        %v1067 = vpop.f32.mrb[0].mxu0
        %1068 = vmatprep.mubr.f32.mxu0 0.0
        %1069 = vmatmul.mubr.f32.gmra.mrb[0].mxu0 %v850
        %v1070 = vpop.f32.mrb[0].mxu0
        %v1071 = vadd.f32 %v779, %v1070
        %v1072 = vpop.f32.mrb[0].mxu0
        %1073 = vmatprep.mubr.f32.mxu0 0.0
        %1074 = vmatmul.mubr.f32.gmra.mrb[0].mxu0 %v852
        %v1075 = vpop.f32.mrb[0].mxu0
        %v1076 = vadd.f32 %v784, %v1075
        %v1077 = vpop.f32.mrb[0].mxu0
        %1078 = vmatprep.mubr.f32.mxu0 0.0
        %1079 = vmatmul.mubr.f32.gmra.mrb[0].mxu0 %v854
        %v1080 = vpop.f32.mrb[0].mxu0
        %v1081 = vadd.f32 %v789, %v1080
        %v1082 = vpop.f32.mrb[0].mxu0
        %1083 = vdwg.mxu0
        %v1085 = vlaneseq
        %v1086 = vshrl.u32 %v1085, 7
        %v1087 = vsub.s32 0, %v1086
        %v1088 = vrot.slane %v365, %v1087
        %v1090 = vadd.f32 %v926, %v1088
        %v1091 = vadd.f32 %v931, %v1088
        %v1092 = vadd.f32 %v936, %v1088
        %v1093 = vadd.f32 %v941, %v1088
        %v1094 = vadd.f32 %v946, %v1088
        %v1095 = vadd.f32 %v951, %v1088
        %v1096 = vadd.f32 %v956, %v1088
        %v1097 = vadd.f32 %v961, %v1088
        %v1098 = vadd.f32 %v966, %v1088
        %v1099 = vadd.f32 %v971, %v1088
        %v1100 = vadd.f32 %v976, %v1088
        %v1101 = vadd.f32 %v981, %v1088
        %v1102 = vadd.f32 %v986, %v1088
        %v1103 = vadd.f32 %v991, %v1088
        %v1104 = vadd.f32 %v996, %v1088
        %v1105 = vadd.f32 %v1001, %v1088
        %v1106 = vadd.f32 %v1006, %v1088
        %v1107 = vadd.f32 %v1011, %v1088
        %v1108 = vadd.f32 %v1016, %v1088
        %v1109 = vadd.f32 %v1021, %v1088
        %v1110 = vadd.f32 %v1026, %v1088
        %v1111 = vadd.f32 %v1031, %v1088
        %v1112 = vadd.f32 %v1036, %v1088
        %v1113 = vadd.f32 %v1041, %v1088
        %v1114 = vadd.f32 %v1046, %v1088
        %v1115 = vadd.f32 %v1051, %v1088
        %v1116 = vadd.f32 %v1056, %v1088
        %v1117 = vadd.f32 %v1061, %v1088
        %v1118 = vadd.f32 %v1066, %v1088
        %v1119 = vadd.f32 %v1071, %v1088
        %v1120 = vadd.f32 %v1076, %v1088
        %v1121 = vadd.f32 %v1081, %v1088
        %v1122 = vmax.f32 %v1090, 0.0
        %v1123 = vmax.f32 %v1091, 0.0
        %v1124 = vmax.f32 %v1092, 0.0
        %v1125 = vmax.f32 %v1093, 0.0
        %v1126 = vmax.f32 %v1094, 0.0
        %v1127 = vmax.f32 %v1095, 0.0
        %v1128 = vmax.f32 %v1096, 0.0
        %v1129 = vmax.f32 %v1097, 0.0
        %v1130 = vmax.f32 %v1098, 0.0
        %v1131 = vmax.f32 %v1099, 0.0
        %v1132 = vmax.f32 %v1100, 0.0
        %v1133 = vmax.f32 %v1101, 0.0
        %v1134 = vmax.f32 %v1102, 0.0
        %v1135 = vmax.f32 %v1103, 0.0
        %v1136 = vmax.f32 %v1104, 0.0
        %v1137 = vmax.f32 %v1105, 0.0
        %v1138 = vmax.f32 %v1106, 0.0
        %v1139 = vmax.f32 %v1107, 0.0
        %v1140 = vmax.f32 %v1108, 0.0
        %v1141 = vmax.f32 %v1109, 0.0
        %v1142 = vmax.f32 %v1110, 0.0
        %v1143 = vmax.f32 %v1111, 0.0
        %v1144 = vmax.f32 %v1112, 0.0
        %v1145 = vmax.f32 %v1113, 0.0
        %v1146 = vmax.f32 %v1114, 0.0
        %v1147 = vmax.f32 %v1115, 0.0
        %v1148 = vmax.f32 %v1116, 0.0
        %v1149 = vmax.f32 %v1117, 0.0
        %v1150 = vmax.f32 %v1118, 0.0
        %v1151 = vmax.f32 %v1119, 0.0
        %v1152 = vmax.f32 %v1120, 0.0
        %v1153 = vmax.f32 %v1121, 0.0
        %vm1154 = vcmask 130048
        %1155 = vst.msk [vmem:[%s309] sm:$0xff] %vm1154, %v1122
        %1156 = vst.msk [vmem:[%s309 + $0x8] sm:$0xff] %vm1154, %v1123
        %1157 = vst.msk [vmem:[%s309 + $0x20] sm:$0xff] %vm1154, %v1124
        %1158 = vst.msk [vmem:[%s309 + $0x28] sm:$0xff] %vm1154, %v1125
        %1159 = vst.msk [vmem:[%s309 + $0x40] sm:$0xff] %vm1154, %v1126
        %1160 = vst.msk [vmem:[%s309 + $0x48] sm:$0xff] %vm1154, %v1127
        %1161 = vst.msk [vmem:[%s309 + $0x60] sm:$0xff] %vm1154, %v1128
        %1162 = vst.msk [vmem:[%s309 + $0x68] sm:$0xff] %vm1154, %v1129
        %1163 = vst.msk [vmem:[%s309 + $0x80] sm:$0xff] %vm1154, %v1130
        %1164 = vst.msk [vmem:[%s309 + $0x88] sm:$0xff] %vm1154, %v1131
        %1165 = vst.msk [vmem:[%s309 + $0xa0] sm:$0xff] %vm1154, %v1132
        %1166 = vst.msk [vmem:[%s309 + $0xa8] sm:$0xff] %vm1154, %v1133
        %1167 = vst.msk [vmem:[%s309 + $0xc0] sm:$0xff] %vm1154, %v1134
        %1168 = vst.msk [vmem:[%s309 + $0xc8] sm:$0xff] %vm1154, %v1135
        %1169 = vst.msk [vmem:[%s309 + $0xe0] sm:$0xff] %vm1154, %v1136
        %1170 = vst.msk [vmem:[%s309 + $0xe8] sm:$0xff] %vm1154, %v1137
        %1171 = vst.msk [vmem:[%s309 + $0x100] sm:$0xff] %vm1154, %v1138
        %1172 = vst.msk [vmem:[%s309 + $0x108] sm:$0xff] %vm1154, %v1139
        %1173 = vst.msk [vmem:[%s309 + $0x120] sm:$0xff] %vm1154, %v1140
        %1174 = vst.msk [vmem:[%s309 + $0x128] sm:$0xff] %vm1154, %v1141
        %1175 = vst.msk [vmem:[%s309 + $0x140] sm:$0xff] %vm1154, %v1142
        %1176 = vst.msk [vmem:[%s309 + $0x148] sm:$0xff] %vm1154, %v1143
        %1177 = vst.msk [vmem:[%s309 + $0x160] sm:$0xff] %vm1154, %v1144
        %1178 = vst.msk [vmem:[%s309 + $0x168] sm:$0xff] %vm1154, %v1145
        %1179 = vst.msk [vmem:[%s309 + $0x180] sm:$0xff] %vm1154, %v1146
        %1180 = vst.msk [vmem:[%s309 + $0x188] sm:$0xff] %vm1154, %v1147
        %1181 = vst.msk [vmem:[%s309 + $0x1a0] sm:$0xff] %vm1154, %v1148
        %1182 = vst.msk [vmem:[%s309 + $0x1a8] sm:$0xff] %vm1154, %v1149
        %1183 = vst.msk [vmem:[%s309 + $0x1c0] sm:$0xff] %vm1154, %v1150
        %1184 = vst.msk [vmem:[%s309 + $0x1c8] sm:$0xff] %vm1154, %v1151
        %1185 = vst.msk [vmem:[%s309 + $0x1e0] sm:$0xff] %vm1154, %v1152
        %1186 = vst.msk [vmem:[%s309 + $0x1e8] sm:$0xff] %vm1154, %v1153
        %s1187 = scalar_lea.vmem [#allocation7], 16
        %v1188 = vld [vmem:[%s1187] sm:$0xf]
        %s1189 = scalar_lea.vmem [#allocation7], 20
        %v1190 = vld [vmem:[%s1189] sm:$0xf]
        %v1192 = vsel %vm563, %v1190, 0
        %1194 = vmatprep.subr.mxu0 0.0
        %1195 = vmatpush1.msra.mxu0 %v1192
        %1196 = vmatprep.subr.mxu0 0.0
        %1197 = vmatpush1.msra.mxu0 0.0
        %1198 = vmatprep.subr.mxu0 0.0
        %1199 = vmatpush1.msra.mxu0 0.0
        %1200 = vmatprep.subr.mxu0 0.0
        %1201 = vmatpush1.msra.mxu0 0.0
        %1202 = vmatprep.subr.mxu0 0.0
        %1203 = vmatpush1.msra.mxu0 0.0
        %1204 = vmatprep.subr.mxu0 0.0
        %1205 = vmatpush1.msra.mxu0 0.0
        %1206 = vmatprep.subr.mxu0 0.0
        %1207 = vmatpush1.msra.mxu0 0.0
        %1208 = vmatprep.subr.mxu0 0.0
        %1209 = vmatpush1.msra.mxu0 0.0
        %1210 = vmatprep.subr.mxu0 0.0
        %1211 = vmatpush1.msra.mxu0 0.0
        %1212 = vmatprep.subr.mxu0 0.0
        %1213 = vmatpush1.msra.mxu0 0.0
        %1214 = vmatprep.subr.mxu0 0.0
        %1215 = vmatpush1.msra.mxu0 0.0
        %1216 = vmatprep.subr.mxu0 0.0
        %1217 = vmatpush1.msra.mxu0 0.0
        %1218 = vmatprep.subr.mxu0 0.0
        %1219 = vmatpush1.msra.mxu0 0.0
        %1220 = vmatprep.subr.mxu0 0.0
        %1221 = vmatpush1.msra.mxu0 0.0
        %1222 = vmatprep.subr.mxu0 0.0
        %1223 = vmatpush1.msra.mxu0 0.0
        %1224 = vmatprep.subr.mxu0 0.0
        %1225 = vmatpush1.msra.mxu0 0.0
        %1226 = vmatprep.subr.mxu0 0.0
        %1227 = vmatpush1.msra.mxu0 0.0
        %1228 = vmatprep.subr.mxu0 0.0
        %1229 = vmatpush1.msra.mxu0 0.0
        %1230 = vmatprep.subr.mxu0 0.0
        %1231 = vmatpush1.msra.mxu0 0.0
        %1232 = vmatprep.subr.mxu0 0.0
        %1233 = vmatpush1.msra.mxu0 0.0
        %1234 = vmatprep.subr.mxu0 0.0
        %1235 = vmatpush1.msra.mxu0 0.0
        %1236 = vmatprep.subr.mxu0 0.0
        %1237 = vmatpush1.msra.mxu0 0.0
        %1238 = vmatprep.subr.mxu0 0.0
        %1239 = vmatpush1.msra.mxu0 0.0
        %1240 = vmatprep.subr.mxu0 0.0
        %1241 = vmatpush1.msra.mxu0 0.0
        %1242 = vmatprep.subr.mxu0 0.0
        %1243 = vmatpush1.msra.mxu0 0.0
        %1244 = vmatprep.subr.mxu0 0.0
        %1245 = vmatpush1.msra.mxu0 0.0
        %1246 = vmatprep.subr.mxu0 0.0
        %1247 = vmatpush1.msra.mxu0 0.0
        %1248 = vmatprep.subr.mxu0 0.0
        %1249 = vmatpush1.msra.mxu0 0.0
        %1250 = vmatprep.subr.mxu0 0.0
        %1251 = vmatpush1.msra.mxu0 0.0
        %1252 = vmatprep.subr.mxu0 0.0
        %1253 = vmatpush1.msra.mxu0 0.0
        %1254 = vmatprep.subr.mxu0 0.0
        %1255 = vmatpush1.msra.mxu0 0.0
        %1256 = vmatprep.subr.mxu0 0.0
        %1257 = vmatpush1.msra.mxu0 0.0
        %1258 = vmatprep.mubr.f32.mxu0 0.0
        %1259 = vmatmul.mubr.f32.gmra.mrb[0].mxu0 %v499
        %v1260 = vpop.f32.mrb[0].mxu0
        %v1261 = vadd.f32 0.0, %v1260
        %v1262 = vpop.f32.mrb[0].mxu0
        %1263 = vmatprep.mubr.f32.mxu0 0.0
        %1264 = vmatmul.mubr.f32.gmra.mrb[0].mxu0 %v501
        %v1265 = vpop.f32.mrb[0].mxu0
        %v1266 = vadd.f32 0.0, %v1265
        %v1267 = vpop.f32.mrb[0].mxu0
        %1268 = vmatprep.mubr.f32.mxu0 0.0
        %1269 = vmatmul.mubr.f32.gmra.mrb[0].mxu0 %v503
        %v1270 = vpop.f32.mrb[0].mxu0
        %v1271 = vadd.f32 0.0, %v1270
        %v1272 = vpop.f32.mrb[0].mxu0
        %1273 = vmatprep.mubr.f32.mxu0 0.0
        %1274 = vmatmul.mubr.f32.gmra.mrb[0].mxu0 %v505
        %v1275 = vpop.f32.mrb[0].mxu0
        %v1276 = vadd.f32 0.0, %v1275
        %v1277 = vpop.f32.mrb[0].mxu0
        %1278 = vmatprep.mubr.f32.mxu0 0.0
        %1279 = vmatmul.mubr.f32.gmra.mrb[0].mxu0 %v507
        %v1280 = vpop.f32.mrb[0].mxu0
        %v1281 = vadd.f32 0.0, %v1280
        %v1282 = vpop.f32.mrb[0].mxu0
        %1283 = vmatprep.mubr.f32.mxu0 0.0
        %1284 = vmatmul.mubr.f32.gmra.mrb[0].mxu0 %v509
        %v1285 = vpop.f32.mrb[0].mxu0
        %v1286 = vadd.f32 0.0, %v1285
        %v1287 = vpop.f32.mrb[0].mxu0
        %1288 = vmatprep.mubr.f32.mxu0 0.0
        %1289 = vmatmul.mubr.f32.gmra.mrb[0].mxu0 %v511
        %v1290 = vpop.f32.mrb[0].mxu0
        %v1291 = vadd.f32 0.0, %v1290
        %v1292 = vpop.f32.mrb[0].mxu0
        %1293 = vmatprep.mubr.f32.mxu0 0.0
        %1294 = vmatmul.mubr.f32.gmra.mrb[0].mxu0 %v513
        %v1295 = vpop.f32.mrb[0].mxu0
        %v1296 = vadd.f32 0.0, %v1295
        %v1297 = vpop.f32.mrb[0].mxu0
        %1298 = vmatprep.mubr.f32.mxu0 0.0
        %1299 = vmatmul.mubr.f32.gmra.mrb[0].mxu0 %v515
        %v1300 = vpop.f32.mrb[0].mxu0
        %v1301 = vadd.f32 0.0, %v1300
        %v1302 = vpop.f32.mrb[0].mxu0
        %1303 = vmatprep.mubr.f32.mxu0 0.0
        %1304 = vmatmul.mubr.f32.gmra.mrb[0].mxu0 %v517
        %v1305 = vpop.f32.mrb[0].mxu0
        %v1306 = vadd.f32 0.0, %v1305
        %v1307 = vpop.f32.mrb[0].mxu0
        %1308 = vmatprep.mubr.f32.mxu0 0.0
        %1309 = vmatmul.mubr.f32.gmra.mrb[0].mxu0 %v519
        %v1310 = vpop.f32.mrb[0].mxu0
        %v1311 = vadd.f32 0.0, %v1310
        %v1312 = vpop.f32.mrb[0].mxu0
        %1313 = vmatprep.mubr.f32.mxu0 0.0
        %1314 = vmatmul.mubr.f32.gmra.mrb[0].mxu0 %v521
        %v1315 = vpop.f32.mrb[0].mxu0
        %v1316 = vadd.f32 0.0, %v1315
        %v1317 = vpop.f32.mrb[0].mxu0
        %1318 = vmatprep.mubr.f32.mxu0 0.0
        %1319 = vmatmul.mubr.f32.gmra.mrb[0].mxu0 %v523
        %v1320 = vpop.f32.mrb[0].mxu0
        %v1321 = vadd.f32 0.0, %v1320
        %v1322 = vpop.f32.mrb[0].mxu0
        %1323 = vmatprep.mubr.f32.mxu0 0.0
        %1324 = vmatmul.mubr.f32.gmra.mrb[0].mxu0 %v525
        %v1325 = vpop.f32.mrb[0].mxu0
        %v1326 = vadd.f32 0.0, %v1325
        %v1327 = vpop.f32.mrb[0].mxu0
        %1328 = vmatprep.mubr.f32.mxu0 0.0
        %1329 = vmatmul.mubr.f32.gmra.mrb[0].mxu0 %v527
        %v1330 = vpop.f32.mrb[0].mxu0
        %v1331 = vadd.f32 0.0, %v1330
        %v1332 = vpop.f32.mrb[0].mxu0
        %1333 = vmatprep.mubr.f32.mxu0 0.0
        %1334 = vmatmul.mubr.f32.gmra.mrb[0].mxu0 %v529
        %v1335 = vpop.f32.mrb[0].mxu0
        %v1336 = vadd.f32 0.0, %v1335
        %v1337 = vpop.f32.mrb[0].mxu0
        %1338 = vmatprep.mubr.f32.mxu0 0.0
        %1339 = vmatmul.mubr.f32.gmra.mrb[0].mxu0 %v531
        %v1340 = vpop.f32.mrb[0].mxu0
        %v1341 = vadd.f32 0.0, %v1340
        %v1342 = vpop.f32.mrb[0].mxu0
        %1343 = vmatprep.mubr.f32.mxu0 0.0
        %1344 = vmatmul.mubr.f32.gmra.mrb[0].mxu0 %v533
        %v1345 = vpop.f32.mrb[0].mxu0
        %v1346 = vadd.f32 0.0, %v1345
        %v1347 = vpop.f32.mrb[0].mxu0
        %1348 = vmatprep.mubr.f32.mxu0 0.0
        %1349 = vmatmul.mubr.f32.gmra.mrb[0].mxu0 %v535
        %v1350 = vpop.f32.mrb[0].mxu0
        %v1351 = vadd.f32 0.0, %v1350
        %v1352 = vpop.f32.mrb[0].mxu0
        %1353 = vmatprep.mubr.f32.mxu0 0.0
        %1354 = vmatmul.mubr.f32.gmra.mrb[0].mxu0 %v537
        %v1355 = vpop.f32.mrb[0].mxu0
        %v1356 = vadd.f32 0.0, %v1355
        %v1357 = vpop.f32.mrb[0].mxu0
        %1358 = vmatprep.mubr.f32.mxu0 0.0
        %1359 = vmatmul.mubr.f32.gmra.mrb[0].mxu0 %v539
        %v1360 = vpop.f32.mrb[0].mxu0
        %v1361 = vadd.f32 0.0, %v1360
        %v1362 = vpop.f32.mrb[0].mxu0
        %1363 = vmatprep.mubr.f32.mxu0 0.0
        %1364 = vmatmul.mubr.f32.gmra.mrb[0].mxu0 %v541
        %v1365 = vpop.f32.mrb[0].mxu0
        %v1366 = vadd.f32 0.0, %v1365
        %v1367 = vpop.f32.mrb[0].mxu0
        %1368 = vmatprep.mubr.f32.mxu0 0.0
        %1369 = vmatmul.mubr.f32.gmra.mrb[0].mxu0 %v543
        %v1370 = vpop.f32.mrb[0].mxu0
        %v1371 = vadd.f32 0.0, %v1370
        %v1372 = vpop.f32.mrb[0].mxu0
        %1373 = vmatprep.mubr.f32.mxu0 0.0
        %1374 = vmatmul.mubr.f32.gmra.mrb[0].mxu0 %v545
        %v1375 = vpop.f32.mrb[0].mxu0
        %v1376 = vadd.f32 0.0, %v1375
        %v1377 = vpop.f32.mrb[0].mxu0
        %1378 = vmatprep.mubr.f32.mxu0 0.0
        %1379 = vmatmul.mubr.f32.gmra.mrb[0].mxu0 %v547
        %v1380 = vpop.f32.mrb[0].mxu0
        %v1381 = vadd.f32 0.0, %v1380
        %v1382 = vpop.f32.mrb[0].mxu0
        %1383 = vmatprep.mubr.f32.mxu0 0.0
        %1384 = vmatmul.mubr.f32.gmra.mrb[0].mxu0 %v549
        %v1385 = vpop.f32.mrb[0].mxu0
        %v1386 = vadd.f32 0.0, %v1385
        %v1387 = vpop.f32.mrb[0].mxu0
        %1388 = vmatprep.mubr.f32.mxu0 0.0
        %1389 = vmatmul.mubr.f32.gmra.mrb[0].mxu0 %v551
        %v1390 = vpop.f32.mrb[0].mxu0
        %v1391 = vadd.f32 0.0, %v1390
        %v1392 = vpop.f32.mrb[0].mxu0
        %1393 = vmatprep.mubr.f32.mxu0 0.0
        %1394 = vmatmul.mubr.f32.gmra.mrb[0].mxu0 %v553
        %v1395 = vpop.f32.mrb[0].mxu0
        %v1396 = vadd.f32 0.0, %v1395
        %v1397 = vpop.f32.mrb[0].mxu0
        %1398 = vmatprep.mubr.f32.mxu0 0.0
        %1399 = vmatmul.mubr.f32.gmra.mrb[0].mxu0 %v555
        %v1400 = vpop.f32.mrb[0].mxu0
        %v1401 = vadd.f32 0.0, %v1400
        %v1402 = vpop.f32.mrb[0].mxu0
        %1403 = vmatprep.mubr.f32.mxu0 0.0
        %1404 = vmatmul.mubr.f32.gmra.mrb[0].mxu0 %v557
        %v1405 = vpop.f32.mrb[0].mxu0
        %v1406 = vadd.f32 0.0, %v1405
        %v1407 = vpop.f32.mrb[0].mxu0
        %1408 = vmatprep.mubr.f32.mxu0 0.0
        %1409 = vmatmul.mubr.f32.gmra.mrb[0].mxu0 %v559
        %v1410 = vpop.f32.mrb[0].mxu0
        %v1411 = vadd.f32 0.0, %v1410
        %v1412 = vpop.f32.mrb[0].mxu0
        %1413 = vmatprep.mubr.f32.mxu0 0.0
        %1414 = vmatmul.mubr.f32.gmra.mrb[0].mxu0 %v561
        %v1415 = vpop.f32.mrb[0].mxu0
        %v1416 = vadd.f32 0.0, %v1415
        %v1417 = vpop.f32.mrb[0].mxu0
        %1418 = vdwg.mxu0
        %v1420 = vsel %vm563, %v1188, 0
        %1422 = vmatprep.subr.mxu0 0.0
        %1423 = vmatpush1.msra.mxu0 %v1420
        %1424 = vmatprep.subr.mxu0 0.0
        %1425 = vmatpush1.msra.mxu0 0.0
        %1426 = vmatprep.subr.mxu0 0.0
        %1427 = vmatpush1.msra.mxu0 0.0
        %1428 = vmatprep.subr.mxu0 0.0
        %1429 = vmatpush1.msra.mxu0 0.0
        %1430 = vmatprep.subr.mxu0 0.0
        %1431 = vmatpush1.msra.mxu0 0.0
        %1432 = vmatprep.subr.mxu0 0.0
        %1433 = vmatpush1.msra.mxu0 0.0
        %1434 = vmatprep.subr.mxu0 0.0
        %1435 = vmatpush1.msra.mxu0 0.0
        %1436 = vmatprep.subr.mxu0 0.0
        %1437 = vmatpush1.msra.mxu0 0.0
        %1438 = vmatprep.subr.mxu0 0.0
        %1439 = vmatpush1.msra.mxu0 0.0
        %1440 = vmatprep.subr.mxu0 0.0
        %1441 = vmatpush1.msra.mxu0 0.0
        %1442 = vmatprep.subr.mxu0 0.0
        %1443 = vmatpush1.msra.mxu0 0.0
        %1444 = vmatprep.subr.mxu0 0.0
        %1445 = vmatpush1.msra.mxu0 0.0
        %1446 = vmatprep.subr.mxu0 0.0
        %1447 = vmatpush1.msra.mxu0 0.0
        %1448 = vmatprep.subr.mxu0 0.0
        %1449 = vmatpush1.msra.mxu0 0.0
        %1450 = vmatprep.subr.mxu0 0.0
        %1451 = vmatpush1.msra.mxu0 0.0
        %1452 = vmatprep.subr.mxu0 0.0
        %1453 = vmatpush1.msra.mxu0 0.0
        %1454 = vmatprep.subr.mxu0 0.0
        %1455 = vmatpush1.msra.mxu0 0.0
        %1456 = vmatprep.subr.mxu0 0.0
        %1457 = vmatpush1.msra.mxu0 0.0
        %1458 = vmatprep.subr.mxu0 0.0
        %1459 = vmatpush1.msra.mxu0 0.0
        %1460 = vmatprep.subr.mxu0 0.0
        %1461 = vmatpush1.msra.mxu0 0.0
        %1462 = vmatprep.subr.mxu0 0.0
        %1463 = vmatpush1.msra.mxu0 0.0
        %1464 = vmatprep.subr.mxu0 0.0
        %1465 = vmatpush1.msra.mxu0 0.0
        %1466 = vmatprep.subr.mxu0 0.0
        %1467 = vmatpush1.msra.mxu0 0.0
        %1468 = vmatprep.subr.mxu0 0.0
        %1469 = vmatpush1.msra.mxu0 0.0
        %1470 = vmatprep.subr.mxu0 0.0
        %1471 = vmatpush1.msra.mxu0 0.0
        %1472 = vmatprep.subr.mxu0 0.0
        %1473 = vmatpush1.msra.mxu0 0.0
        %1474 = vmatprep.subr.mxu0 0.0
        %1475 = vmatpush1.msra.mxu0 0.0
        %1476 = vmatprep.subr.mxu0 0.0
        %1477 = vmatpush1.msra.mxu0 0.0
        %1478 = vmatprep.subr.mxu0 0.0
        %1479 = vmatpush1.msra.mxu0 0.0
        %1480 = vmatprep.subr.mxu0 0.0
        %1481 = vmatpush1.msra.mxu0 0.0
        %1482 = vmatprep.subr.mxu0 0.0
        %1483 = vmatpush1.msra.mxu0 0.0
        %1484 = vmatprep.subr.mxu0 0.0
        %1485 = vmatpush1.msra.mxu0 0.0
        %1486 = vmatprep.mubr.f32.mxu0 0.0
        %1487 = vmatmul.mubr.f32.gmra.mrb[0].mxu0 %v792
        %v1488 = vpop.f32.mrb[0].mxu0
        %v1489 = vadd.f32 %v1261, %v1488
        %v1490 = vpop.f32.mrb[0].mxu0
        %1491 = vmatprep.mubr.f32.mxu0 0.0
        %1492 = vmatmul.mubr.f32.gmra.mrb[0].mxu0 %v794
        %v1493 = vpop.f32.mrb[0].mxu0
        %v1494 = vadd.f32 %v1266, %v1493
        %v1495 = vpop.f32.mrb[0].mxu0
        %1496 = vmatprep.mubr.f32.mxu0 0.0
        %1497 = vmatmul.mubr.f32.gmra.mrb[0].mxu0 %v796
        %v1498 = vpop.f32.mrb[0].mxu0
        %v1499 = vadd.f32 %v1271, %v1498
        %v1500 = vpop.f32.mrb[0].mxu0
        %1501 = vmatprep.mubr.f32.mxu0 0.0
        %1502 = vmatmul.mubr.f32.gmra.mrb[0].mxu0 %v798
        %v1503 = vpop.f32.mrb[0].mxu0
        %v1504 = vadd.f32 %v1276, %v1503
        %v1505 = vpop.f32.mrb[0].mxu0
        %1506 = vmatprep.mubr.f32.mxu0 0.0
        %1507 = vmatmul.mubr.f32.gmra.mrb[0].mxu0 %v800
        %v1508 = vpop.f32.mrb[0].mxu0
        %v1509 = vadd.f32 %v1281, %v1508
        %v1510 = vpop.f32.mrb[0].mxu0
        %1511 = vmatprep.mubr.f32.mxu0 0.0
        %1512 = vmatmul.mubr.f32.gmra.mrb[0].mxu0 %v802
        %v1513 = vpop.f32.mrb[0].mxu0
        %v1514 = vadd.f32 %v1286, %v1513
        %v1515 = vpop.f32.mrb[0].mxu0
        %1516 = vmatprep.mubr.f32.mxu0 0.0
        %1517 = vmatmul.mubr.f32.gmra.mrb[0].mxu0 %v804
        %v1518 = vpop.f32.mrb[0].mxu0
        %v1519 = vadd.f32 %v1291, %v1518
        %v1520 = vpop.f32.mrb[0].mxu0
        %1521 = vmatprep.mubr.f32.mxu0 0.0
        %1522 = vmatmul.mubr.f32.gmra.mrb[0].mxu0 %v806
        %v1523 = vpop.f32.mrb[0].mxu0
        %v1524 = vadd.f32 %v1296, %v1523
        %v1525 = vpop.f32.mrb[0].mxu0
        %1526 = vmatprep.mubr.f32.mxu0 0.0
        %1527 = vmatmul.mubr.f32.gmra.mrb[0].mxu0 %v808
        %v1528 = vpop.f32.mrb[0].mxu0
        %v1529 = vadd.f32 %v1301, %v1528
        %v1530 = vpop.f32.mrb[0].mxu0
        %1531 = vmatprep.mubr.f32.mxu0 0.0
        %1532 = vmatmul.mubr.f32.gmra.mrb[0].mxu0 %v810
        %v1533 = vpop.f32.mrb[0].mxu0
        %v1534 = vadd.f32 %v1306, %v1533
        %v1535 = vpop.f32.mrb[0].mxu0
        %1536 = vmatprep.mubr.f32.mxu0 0.0
        %1537 = vmatmul.mubr.f32.gmra.mrb[0].mxu0 %v812
        %v1538 = vpop.f32.mrb[0].mxu0
        %v1539 = vadd.f32 %v1311, %v1538
        %v1540 = vpop.f32.mrb[0].mxu0
        %1541 = vmatprep.mubr.f32.mxu0 0.0
        %1542 = vmatmul.mubr.f32.gmra.mrb[0].mxu0 %v814
        %v1543 = vpop.f32.mrb[0].mxu0
        %v1544 = vadd.f32 %v1316, %v1543
        %v1545 = vpop.f32.mrb[0].mxu0
        %1546 = vmatprep.mubr.f32.mxu0 0.0
        %1547 = vmatmul.mubr.f32.gmra.mrb[0].mxu0 %v816
        %v1548 = vpop.f32.mrb[0].mxu0
        %v1549 = vadd.f32 %v1321, %v1548
        %v1550 = vpop.f32.mrb[0].mxu0
        %1551 = vmatprep.mubr.f32.mxu0 0.0
        %1552 = vmatmul.mubr.f32.gmra.mrb[0].mxu0 %v818
        %v1553 = vpop.f32.mrb[0].mxu0
        %v1554 = vadd.f32 %v1326, %v1553
        %v1555 = vpop.f32.mrb[0].mxu0
        %1556 = vmatprep.mubr.f32.mxu0 0.0
        %1557 = vmatmul.mubr.f32.gmra.mrb[0].mxu0 %v820
        %v1558 = vpop.f32.mrb[0].mxu0
        %v1559 = vadd.f32 %v1331, %v1558
        %v1560 = vpop.f32.mrb[0].mxu0
        %1561 = vmatprep.mubr.f32.mxu0 0.0
        %1562 = vmatmul.mubr.f32.gmra.mrb[0].mxu0 %v822
        %v1563 = vpop.f32.mrb[0].mxu0
        %v1564 = vadd.f32 %v1336, %v1563
        %v1565 = vpop.f32.mrb[0].mxu0
        %1566 = vmatprep.mubr.f32.mxu0 0.0
        %1567 = vmatmul.mubr.f32.gmra.mrb[0].mxu0 %v824
        %v1568 = vpop.f32.mrb[0].mxu0
        %v1569 = vadd.f32 %v1341, %v1568
        %v1570 = vpop.f32.mrb[0].mxu0
        %1571 = vmatprep.mubr.f32.mxu0 0.0
        %1572 = vmatmul.mubr.f32.gmra.mrb[0].mxu0 %v826
        %v1573 = vpop.f32.mrb[0].mxu0
        %v1574 = vadd.f32 %v1346, %v1573
        %v1575 = vpop.f32.mrb[0].mxu0
        %1576 = vmatprep.mubr.f32.mxu0 0.0
        %1577 = vmatmul.mubr.f32.gmra.mrb[0].mxu0 %v828
        %v1578 = vpop.f32.mrb[0].mxu0
        %v1579 = vadd.f32 %v1351, %v1578
        %v1580 = vpop.f32.mrb[0].mxu0
        %1581 = vmatprep.mubr.f32.mxu0 0.0
        %1582 = vmatmul.mubr.f32.gmra.mrb[0].mxu0 %v830
        %v1583 = vpop.f32.mrb[0].mxu0
        %v1584 = vadd.f32 %v1356, %v1583
        %v1585 = vpop.f32.mrb[0].mxu0
        %1586 = vmatprep.mubr.f32.mxu0 0.0
        %1587 = vmatmul.mubr.f32.gmra.mrb[0].mxu0 %v832
        %v1588 = vpop.f32.mrb[0].mxu0
        %v1589 = vadd.f32 %v1361, %v1588
        %v1590 = vpop.f32.mrb[0].mxu0
        %1591 = vmatprep.mubr.f32.mxu0 0.0
        %1592 = vmatmul.mubr.f32.gmra.mrb[0].mxu0 %v834
        %v1593 = vpop.f32.mrb[0].mxu0
        %v1594 = vadd.f32 %v1366, %v1593
        %v1595 = vpop.f32.mrb[0].mxu0
        %1596 = vmatprep.mubr.f32.mxu0 0.0
        %1597 = vmatmul.mubr.f32.gmra.mrb[0].mxu0 %v836
        %v1598 = vpop.f32.mrb[0].mxu0
        %v1599 = vadd.f32 %v1371, %v1598
        %v1600 = vpop.f32.mrb[0].mxu0
        %1601 = vmatprep.mubr.f32.mxu0 0.0
        %1602 = vmatmul.mubr.f32.gmra.mrb[0].mxu0 %v838
        %v1603 = vpop.f32.mrb[0].mxu0
        %v1604 = vadd.f32 %v1376, %v1603
        %v1605 = vpop.f32.mrb[0].mxu0
        %1606 = vmatprep.mubr.f32.mxu0 0.0
        %1607 = vmatmul.mubr.f32.gmra.mrb[0].mxu0 %v840
        %v1608 = vpop.f32.mrb[0].mxu0
        %v1609 = vadd.f32 %v1381, %v1608
        %v1610 = vpop.f32.mrb[0].mxu0
        %1611 = vmatprep.mubr.f32.mxu0 0.0
        %1612 = vmatmul.mubr.f32.gmra.mrb[0].mxu0 %v842
        %v1613 = vpop.f32.mrb[0].mxu0
        %v1614 = vadd.f32 %v1386, %v1613
        %v1615 = vpop.f32.mrb[0].mxu0
        %1616 = vmatprep.mubr.f32.mxu0 0.0
        %1617 = vmatmul.mubr.f32.gmra.mrb[0].mxu0 %v844
        %v1618 = vpop.f32.mrb[0].mxu0
        %v1619 = vadd.f32 %v1391, %v1618
        %v1620 = vpop.f32.mrb[0].mxu0
        %1621 = vmatprep.mubr.f32.mxu0 0.0
        %1622 = vmatmul.mubr.f32.gmra.mrb[0].mxu0 %v846
        %v1623 = vpop.f32.mrb[0].mxu0
        %v1624 = vadd.f32 %v1396, %v1623
        %v1625 = vpop.f32.mrb[0].mxu0
        %1626 = vmatprep.mubr.f32.mxu0 0.0
        %1627 = vmatmul.mubr.f32.gmra.mrb[0].mxu0 %v848
        %v1628 = vpop.f32.mrb[0].mxu0
        %v1629 = vadd.f32 %v1401, %v1628
        %v1630 = vpop.f32.mrb[0].mxu0
        %1631 = vmatprep.mubr.f32.mxu0 0.0
        %1632 = vmatmul.mubr.f32.gmra.mrb[0].mxu0 %v850
        %v1633 = vpop.f32.mrb[0].mxu0
        %v1634 = vadd.f32 %v1406, %v1633
        %v1635 = vpop.f32.mrb[0].mxu0
        %1636 = vmatprep.mubr.f32.mxu0 0.0
        %1637 = vmatmul.mubr.f32.gmra.mrb[0].mxu0 %v852
        %v1638 = vpop.f32.mrb[0].mxu0
        %v1639 = vadd.f32 %v1411, %v1638
        %v1640 = vpop.f32.mrb[0].mxu0
        %1641 = vmatprep.mubr.f32.mxu0 0.0
        %1642 = vmatmul.mubr.f32.gmra.mrb[0].mxu0 %v854
        %v1643 = vpop.f32.mrb[0].mxu0
        %v1644 = vadd.f32 %v1416, %v1643
        %v1645 = vpop.f32.mrb[0].mxu0
        %1646 = vdwg.mxu0
        %s1647 = scalar_lea.vmem [#allocation7], 24
        %v1648 = vld [vmem:[%s1647] sm:$0xf]
        %v1650 = vsel %vm498, %v362, 0
        %v1653 = vsel %vm498, %v363, 0
        %v1656 = vsel %vm563, %v1648, 0
        %1658 = vmatprep.subr.mxu0 0.0
        %1659 = vmatpush1.msra.mxu0 %v1656
        %1660 = vmatprep.subr.mxu0 0.0
        %1661 = vmatpush1.msra.mxu0 0.0
        %1662 = vmatprep.subr.mxu0 0.0
        %1663 = vmatpush1.msra.mxu0 0.0
        %1664 = vmatprep.subr.mxu0 0.0
        %1665 = vmatpush1.msra.mxu0 0.0
        %1666 = vmatprep.subr.mxu0 0.0
        %1667 = vmatpush1.msra.mxu0 0.0
        %1668 = vmatprep.subr.mxu0 0.0
        %1669 = vmatpush1.msra.mxu0 0.0
        %1670 = vmatprep.subr.mxu0 0.0
        %1671 = vmatpush1.msra.mxu0 0.0
        %1672 = vmatprep.subr.mxu0 0.0
        %1673 = vmatpush1.msra.mxu0 0.0
        %1674 = vmatprep.subr.mxu0 0.0
        %1675 = vmatpush1.msra.mxu0 0.0
        %1676 = vmatprep.subr.mxu0 0.0
        %1677 = vmatpush1.msra.mxu0 0.0
        %1678 = vmatprep.subr.mxu0 0.0
        %1679 = vmatpush1.msra.mxu0 0.0
        %1680 = vmatprep.subr.mxu0 0.0
        %1681 = vmatpush1.msra.mxu0 0.0
        %1682 = vmatprep.subr.mxu0 0.0
        %1683 = vmatpush1.msra.mxu0 0.0
        %1684 = vmatprep.subr.mxu0 0.0
        %1685 = vmatpush1.msra.mxu0 0.0
        %1686 = vmatprep.subr.mxu0 0.0
        %1687 = vmatpush1.msra.mxu0 0.0
        %1688 = vmatprep.subr.mxu0 0.0
        %1689 = vmatpush1.msra.mxu0 0.0
        %1690 = vmatprep.subr.mxu0 0.0
        %1691 = vmatpush1.msra.mxu0 0.0
        %1692 = vmatprep.subr.mxu0 0.0
        %1693 = vmatpush1.msra.mxu0 0.0
        %1694 = vmatprep.subr.mxu0 0.0
        %1695 = vmatpush1.msra.mxu0 0.0
        %1696 = vmatprep.subr.mxu0 0.0
        %1697 = vmatpush1.msra.mxu0 0.0
        %1698 = vmatprep.subr.mxu0 0.0
        %1699 = vmatpush1.msra.mxu0 0.0
        %1700 = vmatprep.subr.mxu0 0.0
        %1701 = vmatpush1.msra.mxu0 0.0
        %1702 = vmatprep.subr.mxu0 0.0
        %1703 = vmatpush1.msra.mxu0 0.0
        %1704 = vmatprep.subr.mxu0 0.0
        %1705 = vmatpush1.msra.mxu0 0.0
        %1706 = vmatprep.subr.mxu0 0.0
        %1707 = vmatpush1.msra.mxu0 0.0
        %1708 = vmatprep.subr.mxu0 0.0
        %1709 = vmatpush1.msra.mxu0 0.0
        %1710 = vmatprep.subr.mxu0 0.0
        %1711 = vmatpush1.msra.mxu0 0.0
        %1712 = vmatprep.subr.mxu0 0.0
        %1713 = vmatpush1.msra.mxu0 0.0
        %1714 = vmatprep.subr.mxu0 0.0
        %1715 = vmatpush1.msra.mxu0 0.0
        %1716 = vmatprep.subr.mxu0 0.0
        %1717 = vmatpush1.msra.mxu0 0.0
        %1718 = vmatprep.subr.mxu0 0.0
        %1719 = vmatpush1.msra.mxu0 0.0
        %1720 = vmatprep.subr.mxu0 0.0
        %1721 = vmatpush1.msra.mxu0 0.0
        %1722 = vmatprep.mubr.f32.mxu0 0.0
        %1723 = vmatmul.mubr.f32.gmra.mrb[0].mxu0 %v796
        %v1724 = vpop.f32.mrb[0].mxu0
        %v1725 = vadd.f32 0.0, %v1724
        %v1726 = vpop.f32.mrb[0].mxu0
        %1727 = vmatprep.mubr.f32.mxu0 0.0
        %1728 = vmatmul.mubr.f32.gmra.mrb[0].mxu0 %v798
        %v1729 = vpop.f32.mrb[0].mxu0
        %v1730 = vadd.f32 0.0, %v1729
        %v1731 = vpop.f32.mrb[0].mxu0
        %1732 = vmatprep.mubr.f32.mxu0 0.0
        %1733 = vmatmul.mubr.f32.gmra.mrb[0].mxu0 %v800
        %v1734 = vpop.f32.mrb[0].mxu0
        %v1735 = vadd.f32 0.0, %v1734
        %v1736 = vpop.f32.mrb[0].mxu0
        %1737 = vmatprep.mubr.f32.mxu0 0.0
        %1738 = vmatmul.mubr.f32.gmra.mrb[0].mxu0 %v802
        %v1739 = vpop.f32.mrb[0].mxu0
        %v1740 = vadd.f32 0.0, %v1739
        %v1741 = vpop.f32.mrb[0].mxu0
        %1742 = vmatprep.mubr.f32.mxu0 0.0
        %1743 = vmatmul.mubr.f32.gmra.mrb[0].mxu0 %v804
        %v1744 = vpop.f32.mrb[0].mxu0
        %v1745 = vadd.f32 0.0, %v1744
        %v1746 = vpop.f32.mrb[0].mxu0
        %1747 = vmatprep.mubr.f32.mxu0 0.0
        %1748 = vmatmul.mubr.f32.gmra.mrb[0].mxu0 %v806
        %v1749 = vpop.f32.mrb[0].mxu0
        %v1750 = vadd.f32 0.0, %v1749
        %v1751 = vpop.f32.mrb[0].mxu0
        %1752 = vmatprep.mubr.f32.mxu0 0.0
        %1753 = vmatmul.mubr.f32.gmra.mrb[0].mxu0 %v808
        %v1754 = vpop.f32.mrb[0].mxu0
        %v1755 = vadd.f32 0.0, %v1754
        %v1756 = vpop.f32.mrb[0].mxu0
        %1757 = vmatprep.mubr.f32.mxu0 0.0
        %1758 = vmatmul.mubr.f32.gmra.mrb[0].mxu0 %v810
        %v1759 = vpop.f32.mrb[0].mxu0
        %v1760 = vadd.f32 0.0, %v1759
        %v1761 = vpop.f32.mrb[0].mxu0
        %1762 = vmatprep.mubr.f32.mxu0 0.0
        %1763 = vmatmul.mubr.f32.gmra.mrb[0].mxu0 %v812
        %v1764 = vpop.f32.mrb[0].mxu0
        %v1765 = vadd.f32 0.0, %v1764
        %v1766 = vpop.f32.mrb[0].mxu0
        %1767 = vmatprep.mubr.f32.mxu0 0.0
        %1768 = vmatmul.mubr.f32.gmra.mrb[0].mxu0 %v814
        %v1769 = vpop.f32.mrb[0].mxu0
        %v1770 = vadd.f32 0.0, %v1769
        %v1771 = vpop.f32.mrb[0].mxu0
        %1772 = vmatprep.mubr.f32.mxu0 0.0
        %1773 = vmatmul.mubr.f32.gmra.mrb[0].mxu0 %v816
        %v1774 = vpop.f32.mrb[0].mxu0
        %v1775 = vadd.f32 0.0, %v1774
        %v1776 = vpop.f32.mrb[0].mxu0
        %1777 = vmatprep.mubr.f32.mxu0 0.0
        %1778 = vmatmul.mubr.f32.gmra.mrb[0].mxu0 %v818
        %v1779 = vpop.f32.mrb[0].mxu0
        %v1780 = vadd.f32 0.0, %v1779
        %v1781 = vpop.f32.mrb[0].mxu0
        %1782 = vmatprep.mubr.f32.mxu0 0.0
        %1783 = vmatmul.mubr.f32.gmra.mrb[0].mxu0 %v820
        %v1784 = vpop.f32.mrb[0].mxu0
        %v1785 = vadd.f32 0.0, %v1784
        %v1786 = vpop.f32.mrb[0].mxu0
        %1787 = vmatprep.mubr.f32.mxu0 0.0
        %1788 = vmatmul.mubr.f32.gmra.mrb[0].mxu0 %v822
        %v1789 = vpop.f32.mrb[0].mxu0
        %v1790 = vadd.f32 0.0, %v1789
        %v1791 = vpop.f32.mrb[0].mxu0
        %1792 = vmatprep.mubr.f32.mxu0 0.0
        %1793 = vmatmul.mubr.f32.gmra.mrb[0].mxu0 %v824
        %v1794 = vpop.f32.mrb[0].mxu0
        %v1795 = vadd.f32 0.0, %v1794
        %v1796 = vpop.f32.mrb[0].mxu0
        %1797 = vmatprep.mubr.f32.mxu0 0.0
        %1798 = vmatmul.mubr.f32.gmra.mrb[0].mxu0 %v826
        %v1799 = vpop.f32.mrb[0].mxu0
        %v1800 = vadd.f32 0.0, %v1799
        %v1801 = vpop.f32.mrb[0].mxu0
        %1802 = vmatprep.mubr.f32.mxu0 0.0
        %1803 = vmatmul.mubr.f32.gmra.mrb[0].mxu0 %v828
        %v1804 = vpop.f32.mrb[0].mxu0
        %v1805 = vadd.f32 0.0, %v1804
        %v1806 = vpop.f32.mrb[0].mxu0
        %1807 = vmatprep.mubr.f32.mxu0 0.0
        %1808 = vmatmul.mubr.f32.gmra.mrb[0].mxu0 %v830
        %v1809 = vpop.f32.mrb[0].mxu0
        %v1810 = vadd.f32 0.0, %v1809
        %v1811 = vpop.f32.mrb[0].mxu0
        %1812 = vmatprep.mubr.f32.mxu0 0.0
        %1813 = vmatmul.mubr.f32.gmra.mrb[0].mxu0 %v832
        %v1814 = vpop.f32.mrb[0].mxu0
        %v1815 = vadd.f32 0.0, %v1814
        %v1816 = vpop.f32.mrb[0].mxu0
        %1817 = vmatprep.mubr.f32.mxu0 0.0
        %1818 = vmatmul.mubr.f32.gmra.mrb[0].mxu0 %v834
        %v1819 = vpop.f32.mrb[0].mxu0
        %v1820 = vadd.f32 0.0, %v1819
        %v1821 = vpop.f32.mrb[0].mxu0
        %1822 = vmatprep.mubr.f32.mxu0 0.0
        %1823 = vmatmul.mubr.f32.gmra.mrb[0].mxu0 %v836
        %v1824 = vpop.f32.mrb[0].mxu0
        %v1825 = vadd.f32 0.0, %v1824
        %v1826 = vpop.f32.mrb[0].mxu0
        %1827 = vmatprep.mubr.f32.mxu0 0.0
        %1828 = vmatmul.mubr.f32.gmra.mrb[0].mxu0 %v838
        %v1829 = vpop.f32.mrb[0].mxu0
        %v1830 = vadd.f32 0.0, %v1829
        %v1831 = vpop.f32.mrb[0].mxu0
        %1832 = vmatprep.mubr.f32.mxu0 0.0
        %1833 = vmatmul.mubr.f32.gmra.mrb[0].mxu0 %v840
        %v1834 = vpop.f32.mrb[0].mxu0
        %v1835 = vadd.f32 0.0, %v1834
        %v1836 = vpop.f32.mrb[0].mxu0
        %1837 = vmatprep.mubr.f32.mxu0 0.0
        %1838 = vmatmul.mubr.f32.gmra.mrb[0].mxu0 %v842
        %v1839 = vpop.f32.mrb[0].mxu0
        %v1840 = vadd.f32 0.0, %v1839
        %v1841 = vpop.f32.mrb[0].mxu0
        %1842 = vmatprep.mubr.f32.mxu0 0.0
        %1843 = vmatmul.mubr.f32.gmra.mrb[0].mxu0 %v844
        %v1844 = vpop.f32.mrb[0].mxu0
        %v1845 = vadd.f32 0.0, %v1844
        %v1846 = vpop.f32.mrb[0].mxu0
        %1847 = vmatprep.mubr.f32.mxu0 0.0
        %1848 = vmatmul.mubr.f32.gmra.mrb[0].mxu0 %v846
        %v1849 = vpop.f32.mrb[0].mxu0
        %v1850 = vadd.f32 0.0, %v1849
        %v1851 = vpop.f32.mrb[0].mxu0
        %1852 = vmatprep.mubr.f32.mxu0 0.0
        %1853 = vmatmul.mubr.f32.gmra.mrb[0].mxu0 %v848
        %v1854 = vpop.f32.mrb[0].mxu0
        %v1855 = vadd.f32 0.0, %v1854
        %v1856 = vpop.f32.mrb[0].mxu0
        %1857 = vmatprep.mubr.f32.mxu0 0.0
        %1858 = vmatmul.mubr.f32.gmra.mrb[0].mxu0 %v850
        %v1859 = vpop.f32.mrb[0].mxu0
        %v1860 = vadd.f32 0.0, %v1859
        %v1861 = vpop.f32.mrb[0].mxu0
        %1862 = vmatprep.mubr.f32.mxu0 0.0
        %1863 = vmatmul.mubr.f32.gmra.mrb[0].mxu0 %v852
        %v1864 = vpop.f32.mrb[0].mxu0
        %v1865 = vadd.f32 0.0, %v1864
        %v1866 = vpop.f32.mrb[0].mxu0
        %1867 = vmatprep.mubr.f32.mxu0 0.0
        %1868 = vmatmul.mubr.f32.gmra.mrb[0].mxu0 %v854
        %v1869 = vpop.f32.mrb[0].mxu0
        %v1870 = vadd.f32 0.0, %v1869
        %v1871 = vpop.f32.mrb[0].mxu0
        %1872 = vmatprep.mubr.f32.mxu0 0.0
        %1873 = vmatmul.mubr.f32.gmra.mrb[0].mxu0 %v1650
        %v1874 = vpop.f32.mrb[0].mxu0
        %v1875 = vadd.f32 0.0, %v1874
        %v1876 = vpop.f32.mrb[0].mxu0
        %1877 = vmatprep.mubr.f32.mxu0 0.0
        %1878 = vmatmul.mubr.f32.gmra.mrb[0].mxu0 %v1653
        %v1879 = vpop.f32.mrb[0].mxu0
        %v1880 = vadd.f32 0.0, %v1879
        %v1881 = vpop.f32.mrb[0].mxu0
        %1882 = vdwg.mxu0
        %v1883 = vadd.f32 %v1489, %v1725
        %v1884 = vadd.f32 %v1494, %v1730
        %v1885 = vadd.f32 %v1499, %v1735
        %v1886 = vadd.f32 %v1504, %v1740
        %v1887 = vadd.f32 %v1509, %v1745
        %v1888 = vadd.f32 %v1514, %v1750
        %v1889 = vadd.f32 %v1519, %v1755
        %v1890 = vadd.f32 %v1524, %v1760
        %v1891 = vadd.f32 %v1529, %v1765
        %v1892 = vadd.f32 %v1534, %v1770
        %v1893 = vadd.f32 %v1539, %v1775
        %v1894 = vadd.f32 %v1544, %v1780
        %v1895 = vadd.f32 %v1549, %v1785
        %v1896 = vadd.f32 %v1554, %v1790
        %v1897 = vadd.f32 %v1559, %v1795
        %v1898 = vadd.f32 %v1564, %v1800
        %v1899 = vadd.f32 %v1569, %v1805
        %v1900 = vadd.f32 %v1574, %v1810
        %v1901 = vadd.f32 %v1579, %v1815
        %v1902 = vadd.f32 %v1584, %v1820
        %v1903 = vadd.f32 %v1589, %v1825
        %v1904 = vadd.f32 %v1594, %v1830
        %v1905 = vadd.f32 %v1599, %v1835
        %v1906 = vadd.f32 %v1604, %v1840
        %v1907 = vadd.f32 %v1609, %v1845
        %v1908 = vadd.f32 %v1614, %v1850
        %v1909 = vadd.f32 %v1619, %v1855
        %v1910 = vadd.f32 %v1624, %v1860
        %v1911 = vadd.f32 %v1629, %v1865
        %v1912 = vadd.f32 %v1634, %v1870
        %v1913 = vadd.f32 %v1639, %v1875
        %v1914 = vadd.f32 %v1644, %v1880
        %v1916 = vrot.slane %v362, 1
        %v1917 = vrot.slane %v363, 1
        %v1918 = vsel %vm415, %v1916, %v1917
        %v1919 = vrot.slane %v364, 1
        %v1920 = vsel %vm415, %v1917, %v1919
        %s1921 = scalar_lea.vmem [#allocation7], 28
        %v1922 = vld [vmem:[%s1921] sm:$0xf]
        %v1923 = vsel %vm498, %v1918, 0
        %v1925 = vsel %vm498, %v1920, 0
        %v1928 = vsel %vm563, %v1922, 0
        %1930 = vmatprep.subr.mxu0 0.0
        %1931 = vmatpush1.msra.mxu0 %v1928
        %1932 = vmatprep.subr.mxu0 0.0
        %1933 = vmatpush1.msra.mxu0 0.0
        %1934 = vmatprep.subr.mxu0 0.0
        %1935 = vmatpush1.msra.mxu0 0.0
        %1936 = vmatprep.subr.mxu0 0.0
        %1937 = vmatpush1.msra.mxu0 0.0
        %1938 = vmatprep.subr.mxu0 0.0
        %1939 = vmatpush1.msra.mxu0 0.0
        %1940 = vmatprep.subr.mxu0 0.0
        %1941 = vmatpush1.msra.mxu0 0.0
        %1942 = vmatprep.subr.mxu0 0.0
        %1943 = vmatpush1.msra.mxu0 0.0
        %1944 = vmatprep.subr.mxu0 0.0
        %1945 = vmatpush1.msra.mxu0 0.0
        %1946 = vmatprep.subr.mxu0 0.0
        %1947 = vmatpush1.msra.mxu0 0.0
        %1948 = vmatprep.subr.mxu0 0.0
        %1949 = vmatpush1.msra.mxu0 0.0
        %1950 = vmatprep.subr.mxu0 0.0
        %1951 = vmatpush1.msra.mxu0 0.0
        %1952 = vmatprep.subr.mxu0 0.0
        %1953 = vmatpush1.msra.mxu0 0.0
        %1954 = vmatprep.subr.mxu0 0.0
        %1955 = vmatpush1.msra.mxu0 0.0
        %1956 = vmatprep.subr.mxu0 0.0
        %1957 = vmatpush1.msra.mxu0 0.0
        %1958 = vmatprep.subr.mxu0 0.0
        %1959 = vmatpush1.msra.mxu0 0.0
        %1960 = vmatprep.subr.mxu0 0.0
        %1961 = vmatpush1.msra.mxu0 0.0
        %1962 = vmatprep.subr.mxu0 0.0
        %1963 = vmatpush1.msra.mxu0 0.0
        %1964 = vmatprep.subr.mxu0 0.0
        %1965 = vmatpush1.msra.mxu0 0.0
        %1966 = vmatprep.subr.mxu0 0.0
        %1967 = vmatpush1.msra.mxu0 0.0
        %1968 = vmatprep.subr.mxu0 0.0
        %1969 = vmatpush1.msra.mxu0 0.0
        %1970 = vmatprep.subr.mxu0 0.0
        %1971 = vmatpush1.msra.mxu0 0.0
        %1972 = vmatprep.subr.mxu0 0.0
        %1973 = vmatpush1.msra.mxu0 0.0
        %1974 = vmatprep.subr.mxu0 0.0
        %1975 = vmatpush1.msra.mxu0 0.0
        %1976 = vmatprep.subr.mxu0 0.0
        %1977 = vmatpush1.msra.mxu0 0.0
        %1978 = vmatprep.subr.mxu0 0.0
        %1979 = vmatpush1.msra.mxu0 0.0
        %1980 = vmatprep.subr.mxu0 0.0
        %1981 = vmatpush1.msra.mxu0 0.0
        %1982 = vmatprep.subr.mxu0 0.0
        %1983 = vmatpush1.msra.mxu0 0.0
        %1984 = vmatprep.subr.mxu0 0.0
        %1985 = vmatpush1.msra.mxu0 0.0
        %1986 = vmatprep.subr.mxu0 0.0
        %1987 = vmatpush1.msra.mxu0 0.0
        %1988 = vmatprep.subr.mxu0 0.0
        %1989 = vmatpush1.msra.mxu0 0.0
        %1990 = vmatprep.subr.mxu0 0.0
        %1991 = vmatpush1.msra.mxu0 0.0
        %1992 = vmatprep.subr.mxu0 0.0
        %1993 = vmatpush1.msra.mxu0 0.0
        %1994 = vmatprep.mubr.f32.mxu0 0.0
        %1995 = vmatmul.mubr.f32.gmra.mrb[0].mxu0 %v503
        %v1996 = vpop.f32.mrb[0].mxu0
        %v1997 = vadd.f32 0.0, %v1996
        %v1998 = vpop.f32.mrb[0].mxu0
        %1999 = vmatprep.mubr.f32.mxu0 0.0
        %2000 = vmatmul.mubr.f32.gmra.mrb[0].mxu0 %v505
        %v2001 = vpop.f32.mrb[0].mxu0
        %v2002 = vadd.f32 0.0, %v2001
        %v2003 = vpop.f32.mrb[0].mxu0
        %2004 = vmatprep.mubr.f32.mxu0 0.0
        %2005 = vmatmul.mubr.f32.gmra.mrb[0].mxu0 %v507
        %v2006 = vpop.f32.mrb[0].mxu0
        %v2007 = vadd.f32 0.0, %v2006
        %v2008 = vpop.f32.mrb[0].mxu0
        %2009 = vmatprep.mubr.f32.mxu0 0.0
        %2010 = vmatmul.mubr.f32.gmra.mrb[0].mxu0 %v509
        %v2011 = vpop.f32.mrb[0].mxu0
        %v2012 = vadd.f32 0.0, %v2011
        %v2013 = vpop.f32.mrb[0].mxu0
        %2014 = vmatprep.mubr.f32.mxu0 0.0
        %2015 = vmatmul.mubr.f32.gmra.mrb[0].mxu0 %v511
        %v2016 = vpop.f32.mrb[0].mxu0
        %v2017 = vadd.f32 0.0, %v2016
        %v2018 = vpop.f32.mrb[0].mxu0
        %2019 = vmatprep.mubr.f32.mxu0 0.0
        %2020 = vmatmul.mubr.f32.gmra.mrb[0].mxu0 %v513
        %v2021 = vpop.f32.mrb[0].mxu0
        %v2022 = vadd.f32 0.0, %v2021
        %v2023 = vpop.f32.mrb[0].mxu0
        %2024 = vmatprep.mubr.f32.mxu0 0.0
        %2025 = vmatmul.mubr.f32.gmra.mrb[0].mxu0 %v515
        %v2026 = vpop.f32.mrb[0].mxu0
        %v2027 = vadd.f32 0.0, %v2026
        %v2028 = vpop.f32.mrb[0].mxu0
        %2029 = vmatprep.mubr.f32.mxu0 0.0
        %2030 = vmatmul.mubr.f32.gmra.mrb[0].mxu0 %v517
        %v2031 = vpop.f32.mrb[0].mxu0
        %v2032 = vadd.f32 0.0, %v2031
        %v2033 = vpop.f32.mrb[0].mxu0
        %2034 = vmatprep.mubr.f32.mxu0 0.0
        %2035 = vmatmul.mubr.f32.gmra.mrb[0].mxu0 %v519
        %v2036 = vpop.f32.mrb[0].mxu0
        %v2037 = vadd.f32 0.0, %v2036
        %v2038 = vpop.f32.mrb[0].mxu0
        %2039 = vmatprep.mubr.f32.mxu0 0.0
        %2040 = vmatmul.mubr.f32.gmra.mrb[0].mxu0 %v521
        %v2041 = vpop.f32.mrb[0].mxu0
        %v2042 = vadd.f32 0.0, %v2041
        %v2043 = vpop.f32.mrb[0].mxu0
        %2044 = vmatprep.mubr.f32.mxu0 0.0
        %2045 = vmatmul.mubr.f32.gmra.mrb[0].mxu0 %v523
        %v2046 = vpop.f32.mrb[0].mxu0
        %v2047 = vadd.f32 0.0, %v2046
        %v2048 = vpop.f32.mrb[0].mxu0
        %2049 = vmatprep.mubr.f32.mxu0 0.0
        %2050 = vmatmul.mubr.f32.gmra.mrb[0].mxu0 %v525
        %v2051 = vpop.f32.mrb[0].mxu0
        %v2052 = vadd.f32 0.0, %v2051
        %v2053 = vpop.f32.mrb[0].mxu0
        %2054 = vmatprep.mubr.f32.mxu0 0.0
        %2055 = vmatmul.mubr.f32.gmra.mrb[0].mxu0 %v527
        %v2056 = vpop.f32.mrb[0].mxu0
        %v2057 = vadd.f32 0.0, %v2056
        %v2058 = vpop.f32.mrb[0].mxu0
        %2059 = vmatprep.mubr.f32.mxu0 0.0
        %2060 = vmatmul.mubr.f32.gmra.mrb[0].mxu0 %v529
        %v2061 = vpop.f32.mrb[0].mxu0
        %v2062 = vadd.f32 0.0, %v2061
        %v2063 = vpop.f32.mrb[0].mxu0
        %2064 = vmatprep.mubr.f32.mxu0 0.0
        %2065 = vmatmul.mubr.f32.gmra.mrb[0].mxu0 %v531
        %v2066 = vpop.f32.mrb[0].mxu0
        %v2067 = vadd.f32 0.0, %v2066
        %v2068 = vpop.f32.mrb[0].mxu0
        %2069 = vmatprep.mubr.f32.mxu0 0.0
        %2070 = vmatmul.mubr.f32.gmra.mrb[0].mxu0 %v533
        %v2071 = vpop.f32.mrb[0].mxu0
        %v2072 = vadd.f32 0.0, %v2071
        %v2073 = vpop.f32.mrb[0].mxu0
        %2074 = vmatprep.mubr.f32.mxu0 0.0
        %2075 = vmatmul.mubr.f32.gmra.mrb[0].mxu0 %v535
        %v2076 = vpop.f32.mrb[0].mxu0
        %v2077 = vadd.f32 0.0, %v2076
        %v2078 = vpop.f32.mrb[0].mxu0
        %2079 = vmatprep.mubr.f32.mxu0 0.0
        %2080 = vmatmul.mubr.f32.gmra.mrb[0].mxu0 %v537
        %v2081 = vpop.f32.mrb[0].mxu0
        %v2082 = vadd.f32 0.0, %v2081
        %v2083 = vpop.f32.mrb[0].mxu0
        %2084 = vmatprep.mubr.f32.mxu0 0.0
        %2085 = vmatmul.mubr.f32.gmra.mrb[0].mxu0 %v539
        %v2086 = vpop.f32.mrb[0].mxu0
        %v2087 = vadd.f32 0.0, %v2086
        %v2088 = vpop.f32.mrb[0].mxu0
        %2089 = vmatprep.mubr.f32.mxu0 0.0
        %2090 = vmatmul.mubr.f32.gmra.mrb[0].mxu0 %v541
        %v2091 = vpop.f32.mrb[0].mxu0
        %v2092 = vadd.f32 0.0, %v2091
        %v2093 = vpop.f32.mrb[0].mxu0
        %2094 = vmatprep.mubr.f32.mxu0 0.0
        %2095 = vmatmul.mubr.f32.gmra.mrb[0].mxu0 %v543
        %v2096 = vpop.f32.mrb[0].mxu0
        %v2097 = vadd.f32 0.0, %v2096
        %v2098 = vpop.f32.mrb[0].mxu0
        %2099 = vmatprep.mubr.f32.mxu0 0.0
        %2100 = vmatmul.mubr.f32.gmra.mrb[0].mxu0 %v545
        %v2101 = vpop.f32.mrb[0].mxu0
        %v2102 = vadd.f32 0.0, %v2101
        %v2103 = vpop.f32.mrb[0].mxu0
        %2104 = vmatprep.mubr.f32.mxu0 0.0
        %2105 = vmatmul.mubr.f32.gmra.mrb[0].mxu0 %v547
        %v2106 = vpop.f32.mrb[0].mxu0
        %v2107 = vadd.f32 0.0, %v2106
        %v2108 = vpop.f32.mrb[0].mxu0
        %2109 = vmatprep.mubr.f32.mxu0 0.0
        %2110 = vmatmul.mubr.f32.gmra.mrb[0].mxu0 %v549
        %v2111 = vpop.f32.mrb[0].mxu0
        %v2112 = vadd.f32 0.0, %v2111
        %v2113 = vpop.f32.mrb[0].mxu0
        %2114 = vmatprep.mubr.f32.mxu0 0.0
        %2115 = vmatmul.mubr.f32.gmra.mrb[0].mxu0 %v551
        %v2116 = vpop.f32.mrb[0].mxu0
        %v2117 = vadd.f32 0.0, %v2116
        %v2118 = vpop.f32.mrb[0].mxu0
        %2119 = vmatprep.mubr.f32.mxu0 0.0
        %2120 = vmatmul.mubr.f32.gmra.mrb[0].mxu0 %v553
        %v2121 = vpop.f32.mrb[0].mxu0
        %v2122 = vadd.f32 0.0, %v2121
        %v2123 = vpop.f32.mrb[0].mxu0
        %2124 = vmatprep.mubr.f32.mxu0 0.0
        %2125 = vmatmul.mubr.f32.gmra.mrb[0].mxu0 %v555
        %v2126 = vpop.f32.mrb[0].mxu0
        %v2127 = vadd.f32 0.0, %v2126
        %v2128 = vpop.f32.mrb[0].mxu0
        %2129 = vmatprep.mubr.f32.mxu0 0.0
        %2130 = vmatmul.mubr.f32.gmra.mrb[0].mxu0 %v557
        %v2131 = vpop.f32.mrb[0].mxu0
        %v2132 = vadd.f32 0.0, %v2131
        %v2133 = vpop.f32.mrb[0].mxu0
        %2134 = vmatprep.mubr.f32.mxu0 0.0
        %2135 = vmatmul.mubr.f32.gmra.mrb[0].mxu0 %v559
        %v2136 = vpop.f32.mrb[0].mxu0
        %v2137 = vadd.f32 0.0, %v2136
        %v2138 = vpop.f32.mrb[0].mxu0
        %2139 = vmatprep.mubr.f32.mxu0 0.0
        %2140 = vmatmul.mubr.f32.gmra.mrb[0].mxu0 %v561
        %v2141 = vpop.f32.mrb[0].mxu0
        %v2142 = vadd.f32 0.0, %v2141
        %v2143 = vpop.f32.mrb[0].mxu0
        %2144 = vmatprep.mubr.f32.mxu0 0.0
        %2145 = vmatmul.mubr.f32.gmra.mrb[0].mxu0 %v1923
        %v2146 = vpop.f32.mrb[0].mxu0
        %v2147 = vadd.f32 0.0, %v2146
        %v2148 = vpop.f32.mrb[0].mxu0
        %2149 = vmatprep.mubr.f32.mxu0 0.0
        %2150 = vmatmul.mubr.f32.gmra.mrb[0].mxu0 %v1925
        %v2151 = vpop.f32.mrb[0].mxu0
        %v2152 = vadd.f32 0.0, %v2151
        %v2153 = vpop.f32.mrb[0].mxu0
        %2154 = vdwg.mxu0
        %v2155 = vadd.f32 %v1883, %v1997
        %v2156 = vadd.f32 %v1884, %v2002
        %v2157 = vadd.f32 %v1885, %v2007
        %v2158 = vadd.f32 %v1886, %v2012
        %v2159 = vadd.f32 %v1887, %v2017
        %v2160 = vadd.f32 %v1888, %v2022
        %v2161 = vadd.f32 %v1889, %v2027
        %v2162 = vadd.f32 %v1890, %v2032
        %v2163 = vadd.f32 %v1891, %v2037
        %v2164 = vadd.f32 %v1892, %v2042
        %v2165 = vadd.f32 %v1893, %v2047
        %v2166 = vadd.f32 %v1894, %v2052
        %v2167 = vadd.f32 %v1895, %v2057
        %v2168 = vadd.f32 %v1896, %v2062
        %v2169 = vadd.f32 %v1897, %v2067
        %v2170 = vadd.f32 %v1898, %v2072
        %v2171 = vadd.f32 %v1899, %v2077
        %v2172 = vadd.f32 %v1900, %v2082
        %v2173 = vadd.f32 %v1901, %v2087
        %v2174 = vadd.f32 %v1902, %v2092
        %v2175 = vadd.f32 %v1903, %v2097
        %v2176 = vadd.f32 %v1904, %v2102
        %v2177 = vadd.f32 %v1905, %v2107
        %v2178 = vadd.f32 %v1906, %v2112
        %v2179 = vadd.f32 %v1907, %v2117
        %v2180 = vadd.f32 %v1908, %v2122
        %v2181 = vadd.f32 %v1909, %v2127
        %v2182 = vadd.f32 %v1910, %v2132
        %v2183 = vadd.f32 %v1911, %v2137
        %v2184 = vadd.f32 %v1912, %v2142
        %v2185 = vadd.f32 %v1913, %v2147
        %v2186 = vadd.f32 %v1914, %v2152
        %v2187 = vadd.f32 %v2155, %v1088
        %v2188 = vadd.f32 %v2156, %v1088
        %v2189 = vadd.f32 %v2157, %v1088
        %v2190 = vadd.f32 %v2158, %v1088
        %v2191 = vadd.f32 %v2159, %v1088
        %v2192 = vadd.f32 %v2160, %v1088
        %v2193 = vadd.f32 %v2161, %v1088
        %v2194 = vadd.f32 %v2162, %v1088
        %v2195 = vadd.f32 %v2163, %v1088
        %v2196 = vadd.f32 %v2164, %v1088
        %v2197 = vadd.f32 %v2165, %v1088
        %v2198 = vadd.f32 %v2166, %v1088
        %v2199 = vadd.f32 %v2167, %v1088
        %v2200 = vadd.f32 %v2168, %v1088
        %v2201 = vadd.f32 %v2169, %v1088
        %v2202 = vadd.f32 %v2170, %v1088
        %v2203 = vadd.f32 %v2171, %v1088
        %v2204 = vadd.f32 %v2172, %v1088
        %v2205 = vadd.f32 %v2173, %v1088
        %v2206 = vadd.f32 %v2174, %v1088
        %v2207 = vadd.f32 %v2175, %v1088
        %v2208 = vadd.f32 %v2176, %v1088
        %v2209 = vadd.f32 %v2177, %v1088
        %v2210 = vadd.f32 %v2178, %v1088
        %v2211 = vadd.f32 %v2179, %v1088
        %v2212 = vadd.f32 %v2180, %v1088
        %v2213 = vadd.f32 %v2181, %v1088
        %v2214 = vadd.f32 %v2182, %v1088
        %v2215 = vadd.f32 %v2183, %v1088
        %v2216 = vadd.f32 %v2184, %v1088
        %v2217 = vadd.f32 %v2185, %v1088
        %v2218 = vadd.f32 %v2186, %v1088
        %v2219 = vmax.f32 %v2187, 0.0
        %v2220 = vmax.f32 %v2188, 0.0
        %v2221 = vmax.f32 %v2189, 0.0
        %v2222 = vmax.f32 %v2190, 0.0
        %v2223 = vmax.f32 %v2191, 0.0
        %v2224 = vmax.f32 %v2192, 0.0
        %v2225 = vmax.f32 %v2193, 0.0
        %v2226 = vmax.f32 %v2194, 0.0
        %v2227 = vmax.f32 %v2195, 0.0
        %v2228 = vmax.f32 %v2196, 0.0
        %v2229 = vmax.f32 %v2197, 0.0
        %v2230 = vmax.f32 %v2198, 0.0
        %v2231 = vmax.f32 %v2199, 0.0
        %v2232 = vmax.f32 %v2200, 0.0
        %v2233 = vmax.f32 %v2201, 0.0
        %v2234 = vmax.f32 %v2202, 0.0
        %v2235 = vmax.f32 %v2203, 0.0
        %v2236 = vmax.f32 %v2204, 0.0
        %v2237 = vmax.f32 %v2205, 0.0
        %v2238 = vmax.f32 %v2206, 0.0
        %v2239 = vmax.f32 %v2207, 0.0
        %v2240 = vmax.f32 %v2208, 0.0
        %v2241 = vmax.f32 %v2209, 0.0
        %v2242 = vmax.f32 %v2210, 0.0
        %v2243 = vmax.f32 %v2211, 0.0
        %v2244 = vmax.f32 %v2212, 0.0
        %v2245 = vmax.f32 %v2213, 0.0
        %v2246 = vmax.f32 %v2214, 0.0
        %v2247 = vmax.f32 %v2215, 0.0
        %v2248 = vmax.f32 %v2216, 0.0
        %v2249 = vmax.f32 %v2217, 0.0
        %v2250 = vmax.f32 %v2218, 0.0
        %s2251 = scalar_lea.vmem %s309, 16 [#allocation10]
        %2252 = vst.msk [vmem:[%s2251] sm:$0xff] %vm1154, %v2219
        %2253 = vst.msk [vmem:[%s2251 + $0x8] sm:$0xff] %vm1154, %v2220
        %2254 = vst.msk [vmem:[%s2251 + $0x20] sm:$0xff] %vm1154, %v2221
        %2255 = vst.msk [vmem:[%s2251 + $0x28] sm:$0xff] %vm1154, %v2222
        %2256 = vst.msk [vmem:[%s2251 + $0x40] sm:$0xff] %vm1154, %v2223
        %2257 = vst.msk [vmem:[%s2251 + $0x48] sm:$0xff] %vm1154, %v2224
        %2258 = vst.msk [vmem:[%s2251 + $0x60] sm:$0xff] %vm1154, %v2225
        %2259 = vst.msk [vmem:[%s2251 + $0x68] sm:$0xff] %vm1154, %v2226
        %2260 = vst.msk [vmem:[%s2251 + $0x80] sm:$0xff] %vm1154, %v2227
        %2261 = vst.msk [vmem:[%s2251 + $0x88] sm:$0xff] %vm1154, %v2228
        %2262 = vst.msk [vmem:[%s2251 + $0xa0] sm:$0xff] %vm1154, %v2229
        %2263 = vst.msk [vmem:[%s2251 + $0xa8] sm:$0xff] %vm1154, %v2230
        %2264 = vst.msk [vmem:[%s2251 + $0xc0] sm:$0xff] %vm1154, %v2231
        %2265 = vst.msk [vmem:[%s2251 + $0xc8] sm:$0xff] %vm1154, %v2232
        %2266 = vst.msk [vmem:[%s2251 + $0xe0] sm:$0xff] %vm1154, %v2233
        %2267 = vst.msk [vmem:[%s2251 + $0xe8] sm:$0xff] %vm1154, %v2234
        %2268 = vst.msk [vmem:[%s2251 + $0x100] sm:$0xff] %vm1154, %v2235
        %2269 = vst.msk [vmem:[%s2251 + $0x108] sm:$0xff] %vm1154, %v2236
        %2270 = vst.msk [vmem:[%s2251 + $0x120] sm:$0xff] %vm1154, %v2237
        %2271 = vst.msk [vmem:[%s2251 + $0x128] sm:$0xff] %vm1154, %v2238
        %2272 = vst.msk [vmem:[%s2251 + $0x140] sm:$0xff] %vm1154, %v2239
        %2273 = vst.msk [vmem:[%s2251 + $0x148] sm:$0xff] %vm1154, %v2240
        %2274 = vst.msk [vmem:[%s2251 + $0x160] sm:$0xff] %vm1154, %v2241
        %2275 = vst.msk [vmem:[%s2251 + $0x168] sm:$0xff] %vm1154, %v2242
        %2276 = vst.msk [vmem:[%s2251 + $0x180] sm:$0xff] %vm1154, %v2243
        %2277 = vst.msk [vmem:[%s2251 + $0x188] sm:$0xff] %vm1154, %v2244
        %2278 = vst.msk [vmem:[%s2251 + $0x1a0] sm:$0xff] %vm1154, %v2245
        %2279 = vst.msk [vmem:[%s2251 + $0x1a8] sm:$0xff] %vm1154, %v2246
        %2280 = vst.msk [vmem:[%s2251 + $0x1c0] sm:$0xff] %vm1154, %v2247
        %2281 = vst.msk [vmem:[%s2251 + $0x1c8] sm:$0xff] %vm1154, %v2248
        %2282 = vst.msk [vmem:[%s2251 + $0x1e0] sm:$0xff] %vm1154, %v2249
        %2283 = vst.msk [vmem:[%s2251 + $0x1e8] sm:$0xff] %vm1154, %v2250
        %s2284 = sand.u32 %s147, 1
        %s2285 = scalar_lea.sflag [#allocation4], %s2284
        %s2286 = sand.u32 %s147, 1
        %s2287 = smul.addr %s2286, 512
        %s2288 = scalar_lea.vmem [#allocation10], %s2287
        // Predicated region
        $region53: #{upconv_pallas.1} parent=35 // pred_check
          %p2289 = pneg %p157
        $region54: #{upconv_pallas.1} parent=35 // pred_check_branch
          %2291 = sbr.rel (%p2289) target = $region56
        $region55: #{upconv_pallas.1} parent=35 // pred_region
          %s2292 = smul.u32 16, %s30
          %s2294 = ssub.s32 8192, 8192
          %2295 = vsyncadd %s2285, %s2294
          %s2296 = smul.addr %s2292, 4
          %s2297 = smul.addr %s29, 64
          %s2298 = sadd.s32 %s2296, %s2297
          %s2299 = smul.addr %s2298, 128
          %s2300 = scalar_lea.hbm %s4, %s2299
          %s2301 = sshll.u32 %s2288, 4
          %s2302 = int_to_ptr.vmem [resolvable:$true] %s2301
          %2307 = dma.vmem_to_hbm [thread:$0]  %s2302, 8192, %s2300, %s2285, 128, 128, 8
        $region56: #{upconv_pallas.1} parent=35 // pred_fallthru
          _
      $region36: #{upconv_pallas.1} parent=5 // pred_fallthru
        _
      %p2308 = scmp.le.s32.totalorder 2, %s20
      // Predicated region
      $region57: #{upconv_pallas.1} parent=5 // pred_check
        %p2309 = pneg %p2308
      $region58: #{upconv_pallas.1} parent=5 // pred_check_branch
        %2311 = sbr.rel (%p2309) target = $region60
      $region59: #{upconv_pallas.1} parent=5 // pred_region
        %s2312 = ssub.s32 %s20, 2
        // Predicated region
        $region61: #{upconv_pallas.1} parent=59 // pred_check
          %p2313 = pneg %p163
        $region62: #{upconv_pallas.1} parent=59 // pred_check_branch
          %2315 = sbr.rel (%p2313) target = $region64
        $region63: #{upconv_pallas.1} parent=59 // pred_region
          %s2316 = sand.u32 %s148, 1
          %s2317 = scalar_lea.sflag [#allocation4], %s2316
          %s2318 = sand.u32 %s148, 1
          %s2319 = smul.addr %s2318, 512
          %s2320 = scalar_lea.vmem [#allocation10], %s2319
          %2321 = dma.done %s2317, 8192
        $region64: #{upconv_pallas.1} parent=59 // pred_fallthru
          _
      $region60: #{upconv_pallas.1} parent=5 // pred_fallthru
        _
    $region6: #{upconv_pallas.1} parent=1 // loop_footer
      %s24 = sadd.s32 1, %s20
    $region7: #{upconv_pallas.1} parent=1 // loop_footer_branch
      %19 = sbr.rel target = $region3
    $region8: #{upconv_pallas.1} parent=1 // loop_exit
      _
    %2322 = vsyncpa [#allocation3], 1
    %s2323 = scalar_lea.sflag [#allocation3], 1
    %2324 = vsyncpa %s2323, 1
    %2325 = vsyncpa [#allocation6], 1
    %s2326 = scalar_lea.sflag [#allocation6], 1
    %2327 = vsyncpa %s2326, 1
    %2328 = vsyncpa [#allocation9], 1
    %2329 = vsyncpa [#allocation4], 1
    %s2330 = scalar_lea.sflag [#allocation4], 1
    %2331 = vsyncpa %s2330, 1

</llo_original>
